<compile_context>
chip_gen: v5e
topology: v5e:2x2
jax: 0.10.0
libtpu: 0.0.40
codegen_flags: <defaults>
</compile_context>

<pallas_src>
import jax
import jax.numpy as jnp
from jax.experimental import pallas as pl
from jax.experimental.pallas import tpu as pltpu


def _round_up(x, m):
    return (x + m - 1) // m * m


def dino_featurizer_kernel(xp_ref, wp_ref, bp_ref, w1_ref, b1_ref, w2_ref, b2_ref,
                           feat_ref, seg_ref):
    """Fused: patch-embed matmul -> (1x1 conv, ReLU, 1x1 conv) segmentation head.

    xp_ref : (TM, Cpp_pad) bf16    flattened patch tile
    wp_ref : (Cpp_pad, D_pad) bf16 patch-embed weight (resident)
    bp_ref : (1, D_pad) bf16
    w1_ref : (D_pad, D_pad) bf16   seg-head conv1 (1x1 conv == channel matmul)
    b1_ref : (1, D_pad) bf16
    w2_ref : (D_pad, K_pad) bf16   seg-head conv2
    b2_ref : (1, K_pad) bf16
    feat_ref: (TM, D_pad) bf16     image_feat tokens (output)
    seg_ref : (TM, K_pad) bf16     segmented_feat tokens (output)
    """
    x = xp_ref[...]
    # backbone stand-in: patch embedding (bf16 operands, f32 MXU accumulation,
    # bf16 epilogue).
    feat = jnp.dot(x, wp_ref[...],
                   preferred_element_type=jnp.float32).astype(jnp.bfloat16)
    feat = feat + bp_ref[...]
    # segmentation head: Conv2d(D,D,1x1) -> ReLU -> Conv2d(D,dim,1x1)
    h = jnp.dot(feat, w1_ref[...],
                preferred_element_type=jnp.float32).astype(jnp.bfloat16)
    h = jnp.maximum(h + b1_ref[...], 0.0)
    seg = jnp.dot(h, w2_ref[...],
                  preferred_element_type=jnp.float32).astype(jnp.bfloat16)
    seg = seg + b2_ref[...]
    feat_ref[...] = feat
    seg_ref[...] = seg


def dino_featurizer_forward(img, params, patch_size, *, tm=1024):
    """img: (B, C, H, W) NCHW float32.  Returns (segmented_feat, image_feat) in NCHW f32."""
    B, C, H, W = img.shape
    p = patch_size
    fh, fw = H // p, W // p
    M = B * fh * fw

    wp, bp, w1, b1, w2, b2 = (params["wp"], params["bp"], params["w1"],
                              params["b1"], params["w2"], params["b2"])
    Cpp, D = wp.shape
    K = w2.shape[1]

    # Lane-dense (multiple-of-128) channel dims; zero padding keeps math exact.
    Cpp_pad = _round_up(Cpp, 128)
    D_pad = _round_up(D, 128)
    K_pad = _round_up(K, 128)

    wp_p = jnp.zeros((Cpp_pad, D_pad), jnp.bfloat16).at[:Cpp, :D].set(wp.astype(jnp.bfloat16))
    bp_p = jnp.zeros((1, D_pad), jnp.bfloat16).at[:, :D].set(bp.astype(jnp.bfloat16))
    w1_p = jnp.zeros((D_pad, D_pad), jnp.bfloat16).at[:D, :D].set(w1.astype(jnp.bfloat16))
    b1_p = jnp.zeros((1, D_pad), jnp.bfloat16).at[:, :D].set(b1.astype(jnp.bfloat16))
    w2_p = jnp.zeros((D_pad, K_pad), jnp.bfloat16).at[:D, :K].set(w2.astype(jnp.bfloat16))
    b2_p = jnp.zeros((1, K_pad), jnp.bfloat16).at[:, :K].set(b2.astype(jnp.bfloat16))

    # im2col for the patch-embed "conv": (B,C,H,W) -> (B*fh*fw, C*p*p)
    # channel-major flattening matches PyTorch Conv2d weight layout (D, C, p, p).
    xp = (img.reshape(B, C, fh, p, fw, p)
             .transpose(0, 2, 4, 1, 3, 5)
             .reshape(M, Cpp))

    # Balanced token tiling: no near-empty padded tiles, >=2 (even) programs
    # when there are enough rows so v7x megacore sharding gets both cores busy.
    target_tiles = max(pl.cdiv(M, tm), 1)
    if M > 16:
        target_tiles = max(target_tiles, 2)
        target_tiles += target_tiles % 2        # even split across 2 TCs (v7x)
    TM = _round_up(pl.cdiv(M, target_tiles), 16)   # 16: bf16 sublane packing
    num_tiles = pl.cdiv(M, TM)
    M_pad = num_tiles * TM

    # Cast to bf16 *before* padding so the materialized intermediate is small.
    xp = jnp.pad(xp.astype(jnp.bfloat16),
                 ((0, M_pad - M), (0, Cpp_pad - Cpp)))

    # Advisory cost estimate + generation-aware scoped-VMEM budget.
    flops = 2 * M_pad * (Cpp_pad * D_pad + D_pad * D_pad + D_pad * K_pad)
    bytes_accessed = (xp.size * 2
                      + (wp_p.size + w1_p.size + w2_p.size
                         + bp_p.size + b1_p.size + b2_p.size) * 2
                      + (M_pad * D_pad + M_pad * K_pad) * 2)
    tile_io_bytes = TM * (Cpp_pad + D_pad + K_pad) * 2
    weight_bytes = (wp_p.size + w1_p.size + w2_p.size
                    + bp_p.size + b1_p.size + b2_p.size) * 2
    try:
        vmem_cap = int(pltpu.get_tpu_info().vmem_capacity_bytes)
    except Exception:
        vmem_cap = 64 << 20   # conservative: v7x per-TC VMEM
    vmem_needed = 2 * tile_io_bytes + 2 * weight_bytes + (8 << 20)
    vmem_limit = int(min(max(vmem_needed, 32 << 20), vmem_cap - (8 << 20)))

    def _const_spec(shape, single_buffered):
        ndim = len(shape)
        index_map = lambda i: (0,) * ndim
        if single_buffered:
            # Resident weights/biases: no benefit from double-buffering.
            return pl.BlockSpec(shape, index_map, pipeline_mode=pl.Buffered(1))
        return pl.BlockSpec(shape, index_map)

    def _run(single_buffered_weights):
        in_specs = [
            pl.BlockSpec((TM, Cpp_pad), lambda i: (i, 0)),                  # xp tile
            _const_spec((Cpp_pad, D_pad), single_buffered_weights),         # wp
            _const_spec((1, D_pad), single_buffered_weights),               # bp
            _const_spec((D_pad, D_pad), single_buffered_weights),           # w1
            _const_spec((1, D_pad), single_buffered_weights),               # b1
            _const_spec((D_pad, K_pad), single_buffered_weights),           # w2
            _const_spec((1, K_pad), single_buffered_weights),               # b2
        ]
        return pl.pallas_call(
            dino_featurizer_kernel,
            out_shape=(jax.ShapeDtypeStruct((M_pad, D_pad), jnp.bfloat16),
                       jax.ShapeDtypeStruct((M_pad, K_pad), jnp.bfloat16)),
            grid=(num_tiles,),
            in_specs=in_specs,
            out_specs=(pl.BlockSpec((TM, D_pad), lambda i: (i, 0)),
                       pl.BlockSpec((TM, K_pad), lambda i: (i, 0))),
            compiler_params=pltpu.CompilerParams(
                dimension_semantics=("parallel",),
                vmem_limit_bytes=vmem_limit),
            cost_estimate=pl.CostEstimate(flops=int(flops),
                                          transcendentals=0,
                                          bytes_accessed=int(bytes_accessed)),
        )(xp, wp_p, bp_p, w1_p, b1_p, w2_p, b2_p)

    try:
        feat_tok, seg_tok = _run(True)
    except Exception:
        # Fallback for JAX versions without pipeline_mode / Buffered(1) support.
        feat_tok, seg_tok = _run(False)

    # Strip padding, then tokens (M, D) -> NCHW (mirrors
    #   feat[:, 1:, :].reshape(B, fh, fw, D).permute(0, 3, 1, 2)),
    # casting back to f32 fused with the transpose.
    feat_tok = feat_tok[:M, :D]
    seg_tok = seg_tok[:M, :K]
    image_feat = feat_tok.reshape(B, fh, fw, D).transpose(0, 3, 1, 2).astype(jnp.float32)
    segmented_feat = seg_tok.reshape(B, fh, fw, K).transpose(0, 3, 1, 2).astype(jnp.float32)
    return segmented_feat, image_feat


def init_params(key, in_chans, patch_size, embed_dim, dim):
    """Deterministic synthetic parameters (no checkpoint load)."""
    k1, k2, k3, k4 = jax.random.split(key, 4)
    kpp = in_chans * patch_size * patch_size
    scale_p = 1.0 / jnp.sqrt(kpp)
    scale_1 = 1.0 / jnp.sqrt(embed_dim)
    return {
        "wp": (jax.random.normal(k1, (kpp, embed_dim), jnp.float32) * scale_p),
        "bp": jnp.zeros((1, embed_dim), jnp.float32),
        "w1": (jax.random.normal(k2, (embed_dim, embed_dim), jnp.float32) * scale_1),
        "b1": (jax.random.normal(k3, (1, embed_dim), jnp.float32) * 0.01),
        "w2": (jax.random.normal(k4, (embed_dim, dim), jnp.float32) * scale_1),
        "b2": jnp.zeros((1, dim), jnp.float32),
    }


if __name__ == "__main__":
    # small, shape-consistent config: patch 8 over a 32x32 image -> 4x4 feature map
    B, C, H, W = 2, 3, 32, 32
    patch_size = 8
    embed_dim = 32   # ViT embed dim (stand-in for student.embed_dim)
    dim = 16         # DinoFeaturizer `dim` (segmentation head output channels)

    key = jax.random.PRNGKey(0)
    k_img, k_par = jax.random.split(key)
    img = jax.random.normal(k_img, (B, C, H, W), jnp.float32)
    params = init_params(k_par, C, patch_size, embed_dim, dim)

    segmented_feat, image_feat = dino_featurizer_forward(img, params, patch_size)
    jax.block_until_ready((segmented_feat, image_feat))

    assert image_feat.shape == (B, embed_dim, H // patch_size, W // patch_size)
    assert segmented_feat.shape == (B, dim, H // patch_size, W // patch_size)
    assert bool(jnp.isfinite(image_feat).all()) and bool(jnp.isfinite(segmented_feat).all())
    print("KERNEL_OK")
</pallas_src>

<mosaic_0001>
module attributes {stable_mosaic.version = 11 : i64} {
  func.func @dino_featurizer_kernel(%arg0: i32, %arg1: memref<16x256xbf16, #tpu.memory_space<vmem>>, %arg2: memref<256x128xbf16, #tpu.memory_space<vmem>>, %arg3: memref<1x128xbf16, #tpu.memory_space<vmem>>, %arg4: memref<128x128xbf16, #tpu.memory_space<vmem>>, %arg5: memref<1x128xbf16, #tpu.memory_space<vmem>>, %arg6: memref<128x128xbf16, #tpu.memory_space<vmem>>, %arg7: memref<1x128xbf16, #tpu.memory_space<vmem>>, %arg8: memref<16x128xbf16, #tpu.memory_space<vmem>>, %arg9: memref<16x128xbf16, #tpu.memory_space<vmem>>) attributes {dimension_semantics = [#tpu.dimension_semantics<parallel>], iteration_bounds = array<i64: 2>, scalar_prefetch = 0 : i64, scratch_operands = 0 : i64, tpu.core_type = #tpu.core_type<tc>, window_params = [{transform_indices = @transform_0, window_bounds = array<i64: 16, 256>}, {pipeline_mode = #tpu.pipeline_mode<synchronous>, transform_indices = @transform_1, window_bounds = array<i64: 256, 128>}, {pipeline_mode = #tpu.pipeline_mode<synchronous>, transform_indices = @transform_2, window_bounds = array<i64: 1, 128>}, {pipeline_mode = #tpu.pipeline_mode<synchronous>, transform_indices = @transform_3, window_bounds = array<i64: 128, 128>}, {pipeline_mode = #tpu.pipeline_mode<synchronous>, transform_indices = @transform_4, window_bounds = array<i64: 1, 128>}, {pipeline_mode = #tpu.pipeline_mode<synchronous>, transform_indices = @transform_5, window_bounds = array<i64: 128, 128>}, {pipeline_mode = #tpu.pipeline_mode<synchronous>, transform_indices = @transform_6, window_bounds = array<i64: 1, 128>}, {transform_indices = @transform_7, window_bounds = array<i64: 16, 128>}, {transform_indices = @transform_8, window_bounds = array<i64: 16, 128>}]} {
    %c0 = arith.constant 0 : index
    %c0_0 = arith.constant 0 : index
    %0 = vector.load %arg1[%c0, %c0_0] : memref<16x256xbf16, #tpu.memory_space<vmem>>, vector<16x256xbf16>
    %c0_1 = arith.constant 0 : index
    %c0_2 = arith.constant 0 : index
    %1 = vector.load %arg2[%c0_1, %c0_2] : memref<256x128xbf16, #tpu.memory_space<vmem>>, vector<256x128xbf16>
    %cst = arith.constant dense<0.000000e+00> : vector<16x128xf32>
    %2 = tpu.matmul %0, %1, %cst {dimension_numbers = #tpu.dot_dimension_numbers<[1], [0], [0], [1], [0, 0, 1, 1], [], []>} : vector<16x256xbf16>, vector<256x128xbf16>, vector<16x128xf32> -> vector<16x128xf32>
    %3 = arith.truncf %2 : vector<16x128xf32> to vector<16x128xbf16>
    %c0_3 = arith.constant 0 : index
    %c0_4 = arith.constant 0 : index
    %4 = vector.load %arg3[%c0_3, %c0_4] : memref<1x128xbf16, #tpu.memory_space<vmem>>, vector<1x128xbf16>
    %5 = vector.broadcast %4 : vector<1x128xbf16> to vector<16x128xbf16>
    %6 = arith.addf %3, %5 : vector<16x128xbf16>
    %c0_5 = arith.constant 0 : index
    %c0_6 = arith.constant 0 : index
    %7 = vector.load %arg4[%c0_5, %c0_6] : memref<128x128xbf16, #tpu.memory_space<vmem>>, vector<128x128xbf16>
    %cst_7 = arith.constant dense<0.000000e+00> : vector<16x128xf32>
    %8 = tpu.matmul %6, %7, %cst_7 {dimension_numbers = #tpu.dot_dimension_numbers<[1], [0], [0], [1], [0, 0, 1, 1], [], []>} : vector<16x128xbf16>, vector<128x128xbf16>, vector<16x128xf32> -> vector<16x128xf32>
    %9 = arith.truncf %8 : vector<16x128xf32> to vector<16x128xbf16>
    %c0_8 = arith.constant 0 : index
    %c0_9 = arith.constant 0 : index
    %10 = vector.load %arg5[%c0_8, %c0_9] : memref<1x128xbf16, #tpu.memory_space<vmem>>, vector<1x128xbf16>
    %11 = vector.broadcast %10 : vector<1x128xbf16> to vector<16x128xbf16>
    %12 = arith.addf %9, %11 : vector<16x128xbf16>
    %cst_10 = arith.constant 0.000000e+00 : bf16
    %13 = vector.broadcast %cst_10 : bf16 to vector<16x128xbf16>
    %14 = arith.maximumf %12, %13 : vector<16x128xbf16>
    %c0_11 = arith.constant 0 : index
    %c0_12 = arith.constant 0 : index
    %15 = vector.load %arg6[%c0_11, %c0_12] : memref<128x128xbf16, #tpu.memory_space<vmem>>, vector<128x128xbf16>
    %cst_13 = arith.constant dense<0.000000e+00> : vector<16x128xf32>
    %16 = tpu.matmul %14, %15, %cst_13 {dimension_numbers = #tpu.dot_dimension_numbers<[1], [0], [0], [1], [0, 0, 1, 1], [], []>} : vector<16x128xbf16>, vector<128x128xbf16>, vector<16x128xf32> -> vector<16x128xf32>
    %17 = arith.truncf %16 : vector<16x128xf32> to vector<16x128xbf16>
    %c0_14 = arith.constant 0 : index
    %c0_15 = arith.constant 0 : index
    %18 = vector.load %arg7[%c0_14, %c0_15] : memref<1x128xbf16, #tpu.memory_space<vmem>>, vector<1x128xbf16>
    %19 = vector.broadcast %18 : vector<1x128xbf16> to vector<16x128xbf16>
    %20 = arith.addf %17, %19 : vector<16x128xbf16>
    %c0_16 = arith.constant 0 : index
    %c0_17 = arith.constant 0 : index
    %21 = vector.load %arg8[%c0_16, %c0_17] : memref<16x128xbf16, #tpu.memory_space<vmem>>, vector<16x128xbf16>
    tpu.vector_store %arg8[%c0_16, %c0_17], %6 {strides = array<i32>} : memref<16x128xbf16, #tpu.memory_space<vmem>>, vector<16x128xbf16>,
    %c0_18 = arith.constant 0 : index
    %c0_19 = arith.constant 0 : index
    %22 = vector.load %arg9[%c0_18, %c0_19] : memref<16x128xbf16, #tpu.memory_space<vmem>>, vector<16x128xbf16>
    tpu.vector_store %arg9[%c0_18, %c0_19], %20 {strides = array<i32>} : memref<16x128xbf16, #tpu.memory_space<vmem>>, vector<16x128xbf16>,
    return
  }
  func.func @transform_0(%arg0: i32) -> (i32, i32) {
    %c0_i32 = arith.constant 0 : i32
    %c0_i32_0 = arith.constant 0 : i32
    return %arg0, %c0_i32 : i32, i32
  }
  func.func @transform_1(%arg0: i32) -> (i32, i32) {
    %c0_i32 = arith.constant 0 : i32
    %c0_i32_0 = arith.constant 0 : i32
    %c0_i32_1 = arith.constant 0 : i32
    return %c0_i32, %c0_i32_0 : i32, i32
  }
  func.func @transform_2(%arg0: i32) -> (i32, i32) {
    %c0_i32 = arith.constant 0 : i32
    %c0_i32_0 = arith.constant 0 : i32
    %c0_i32_1 = arith.constant 0 : i32
    return %c0_i32, %c0_i32_0 : i32, i32
  }
  func.func @transform_3(%arg0: i32) -> (i32, i32) {
    %c0_i32 = arith.constant 0 : i32
    %c0_i32_0 = arith.constant 0 : i32
    %c0_i32_1 = arith.constant 0 : i32
    return %c0_i32, %c0_i32_0 : i32, i32
  }
  func.func @transform_4(%arg0: i32) -> (i32, i32) {
    %c0_i32 = arith.constant 0 : i32
    %c0_i32_0 = arith.constant 0 : i32
    %c0_i32_1 = arith.constant 0 : i32
    return %c0_i32, %c0_i32_0 : i32, i32
  }
  func.func @transform_5(%arg0: i32) -> (i32, i32) {
    %c0_i32 = arith.constant 0 : i32
    %c0_i32_0 = arith.constant 0 : i32
    %c0_i32_1 = arith.constant 0 : i32
    return %c0_i32, %c0_i32_0 : i32, i32
  }
  func.func @transform_6(%arg0: i32) -> (i32, i32) {
    %c0_i32 = arith.constant 0 : i32
    %c0_i32_0 = arith.constant 0 : i32
    %c0_i32_1 = arith.constant 0 : i32
    return %c0_i32, %c0_i32_0 : i32, i32
  }
  func.func @transform_7(%arg0: i32) -> (i32, i32) {
    %c0_i32 = arith.constant 0 : i32
    %c0_i32_0 = arith.constant 0 : i32
    return %arg0, %c0_i32 : i32, i32
  }
  func.func @transform_8(%arg0: i32) -> (i32, i32) {
    %c0_i32 = arith.constant 0 : i32
    %c0_i32_0 = arith.constant 0 : i32
    return %arg0, %c0_i32 : i32, i32
  }
}

module attributes {stable_mosaic.version = 11 : i64} {
  func.func @dino_featurizer_kernel(%arg0: i32, %arg1: memref<16x256xbf16, #tpu.memory_space<vmem>>, %arg2: memref<256x128xbf16, #tpu.memory_space<vmem>>, %arg3: memref<1x128xbf16, #tpu.memory_space<vmem>>, %arg4: memref<128x128xbf16, #tpu.memory_space<vmem>>, %arg5: memref<1x128xbf16, #tpu.memory_space<vmem>>, %arg6: memref<128x128xbf16, #tpu.memory_space<vmem>>, %arg7: memref<1x128xbf16, #tpu.memory_space<vmem>>, %arg8: memref<16x128xbf16, #tpu.memory_space<vmem>>, %arg9: memref<16x128xbf16, #tpu.memory_space<vmem>>) attributes {dimension_semantics = [#tpu.dimension_semantics<parallel>], iteration_bounds = array<i64: 2>, scalar_prefetch = 0 : i64, scratch_operands = 0 : i64, tpu.core_type = #tpu.core_type<tc>, window_params = [{transform_indices = @transform_0, window_bounds = array<i64: 16, 256>}, {pipeline_mode = #tpu.pipeline_mode<synchronous>, transform_indices = @transform_1, window_bounds = array<i64: 256, 128>}, {pipeline_mode = #tpu.pipeline_mode<synchronous>, transform_indices = @transform_2, window_bounds = array<i64: 1, 128>}, {pipeline_mode = #tpu.pipeline_mode<synchronous>, transform_indices = @transform_3, window_bounds = array<i64: 128, 128>}, {pipeline_mode = #tpu.pipeline_mode<synchronous>, transform_indices = @transform_4, window_bounds = array<i64: 1, 128>}, {pipeline_mode = #tpu.pipeline_mode<synchronous>, transform_indices = @transform_5, window_bounds = array<i64: 128, 128>}, {pipeline_mode = #tpu.pipeline_mode<synchronous>, transform_indices = @transform_6, window_bounds = array<i64: 1, 128>}, {transform_indices = @transform_7, window_bounds = array<i64: 16, 128>}, {transform_indices = @transform_8, window_bounds = array<i64: 16, 128>}]} {
    %c0 = arith.constant 0 : index
    %c0_0 = arith.constant 0 : index
    %0 = vector.load %arg1[%c0, %c0_0] : memref<16x256xbf16, #tpu.memory_space<vmem>>, vector<16x256xbf16>
    %c0_1 = arith.constant 0 : index
    %c0_2 = arith.constant 0 : index
    %1 = vector.load %arg2[%c0_1, %c0_2] : memref<256x128xbf16, #tpu.memory_space<vmem>>, vector<256x128xbf16>
    %cst = arith.constant dense<0.000000e+00> : vector<16x128xf32>
    %2 = tpu.matmul %0, %1, %cst {dimension_numbers = #tpu.dot_dimension_numbers<[1], [0], [0], [1], [0, 0, 1, 1], [], []>} : vector<16x256xbf16>, vector<256x128xbf16>, vector<16x128xf32> -> vector<16x128xf32>
    %3 = arith.truncf %2 : vector<16x128xf32> to vector<16x128xbf16>
    %c0_3 = arith.constant 0 : index
    %c0_4 = arith.constant 0 : index
    %4 = vector.load %arg3[%c0_3, %c0_4] : memref<1x128xbf16, #tpu.memory_space<vmem>>, vector<1x128xbf16>
    %5 = vector.broadcast %4 : vector<1x128xbf16> to vector<16x128xbf16>
    %6 = arith.addf %3, %5 : vector<16x128xbf16>
    %c0_5 = arith.constant 0 : index
    %c0_6 = arith.constant 0 : index
    %7 = vector.load %arg4[%c0_5, %c0_6] : memref<128x128xbf16, #tpu.memory_space<vmem>>, vector<128x128xbf16>
    %cst_7 = arith.constant dense<0.000000e+00> : vector<16x128xf32>
    %8 = tpu.matmul %6, %7, %cst_7 {dimension_numbers = #tpu.dot_dimension_numbers<[1], [0], [0], [1], [0, 0, 1, 1], [], []>} : vector<16x128xbf16>, vector<128x128xbf16>, vector<16x128xf32> -> vector<16x128xf32>
    %9 = arith.truncf %8 : vector<16x128xf32> to vector<16x128xbf16>
    %c0_8 = arith.constant 0 : index
    %c0_9 = arith.constant 0 : index
    %10 = vector.load %arg5[%c0_8, %c0_9] : memref<1x128xbf16, #tpu.memory_space<vmem>>, vector<1x128xbf16>
    %11 = vector.broadcast %10 : vector<1x128xbf16> to vector<16x128xbf16>
    %12 = arith.addf %9, %11 : vector<16x128xbf16>
    %cst_10 = arith.constant 0.000000e+00 : bf16
    %13 = vector.broadcast %cst_10 : bf16 to vector<16x128xbf16>
    %14 = arith.maximumf %12, %13 : vector<16x128xbf16>
    %c0_11 = arith.constant 0 : index
    %c0_12 = arith.constant 0 : index
    %15 = vector.load %arg6[%c0_11, %c0_12] : memref<128x128xbf16, #tpu.memory_space<vmem>>, vector<128x128xbf16>
    %cst_13 = arith.constant dense<0.000000e+00> : vector<16x128xf32>
    %16 = tpu.matmul %14, %15, %cst_13 {dimension_numbers = #tpu.dot_dimension_numbers<[1], [0], [0], [1], [0, 0, 1, 1], [], []>} : vector<16x128xbf16>, vector<128x128xbf16>, vector<16x128xf32> -> vector<16x128xf32>
    %17 = arith.truncf %16 : vector<16x128xf32> to vector<16x128xbf16>
    %c0_14 = arith.constant 0 : index
    %c0_15 = arith.constant 0 : index
    %18 = vector.load %arg7[%c0_14, %c0_15] : memref<1x128xbf16, #tpu.memory_space<vmem>>, vector<1x128xbf16>
    %19 = vector.broadcast %18 : vector<1x128xbf16> to vector<16x128xbf16>
    %20 = arith.addf %17, %19 : vector<16x128xbf16>
    %c0_16 = arith.constant 0 : index
    %c0_17 = arith.constant 0 : index
    %21 = vector.load %arg8[%c0_16, %c0_17] : memref<16x128xbf16, #tpu.memory_space<vmem>>, vector<16x128xbf16>
    tpu.vector_store %arg8[%c0_16, %c0_17], %6 {strides = array<i32>} : memref<16x128xbf16, #tpu.memory_space<vmem>>, vector<16x128xbf16>,
    %c0_18 = arith.constant 0 : index
    %c0_19 = arith.constant 0 : index
    %22 = vector.load %arg9[%c0_18, %c0_19] : memref<16x128xbf16, #tpu.memory_space<vmem>>, vector<16x128xbf16>
    tpu.vector_store %arg9[%c0_18, %c0_19], %20 {strides = array<i32>} : memref<16x128xbf16, #tpu.memory_space<vmem>>, vector<16x128xbf16>,
    return
  }
  func.func @transform_0(%arg0: i32) -> (i32, i32) {
    %c0_i32 = arith.constant 0 : i32
    %c0_i32_0 = arith.constant 0 : i32
    return %arg0, %c0_i32 : i32, i32
  }
  func.func @transform_1(%arg0: i32) -> (i32, i32) {
    %c0_i32 = arith.constant 0 : i32
    %c0_i32_0 = arith.constant 0 : i32
    %c0_i32_1 = arith.constant 0 : i32
    return %c0_i32, %c0_i32_0 : i32, i32
  }
  func.func @transform_2(%arg0: i32) -> (i32, i32) {
    %c0_i32 = arith.constant 0 : i32
    %c0_i32_0 = arith.constant 0 : i32
    %c0_i32_1 = arith.constant 0 : i32
    return %c0_i32, %c0_i32_0 : i32, i32
  }
  func.func @transform_3(%arg0: i32) -> (i32, i32) {
    %c0_i32 = arith.constant 0 : i32
    %c0_i32_0 = arith.constant 0 : i32
    %c0_i32_1 = arith.constant 0 : i32
    return %c0_i32, %c0_i32_0 : i32, i32
  }
  func.func @transform_4(%arg0: i32) -> (i32, i32) {
    %c0_i32 = arith.constant 0 : i32
    %c0_i32_0 = arith.constant 0 : i32
    %c0_i32_1 = arith.constant 0 : i32
    return %c0_i32, %c0_i32_0 : i32, i32
  }
  func.func @transform_5(%arg0: i32) -> (i32, i32) {
    %c0_i32 = arith.constant 0 : i32
    %c0_i32_0 = arith.constant 0 : i32
    %c0_i32_1 = arith.constant 0 : i32
    return %c0_i32, %c0_i32_0 : i32, i32
  }
  func.func @transform_6(%arg0: i32) -> (i32, i32) {
    %c0_i32 = arith.constant 0 : i32
    %c0_i32_0 = arith.constant 0 : i32
    %c0_i32_1 = arith.constant 0 : i32
    return %c0_i32, %c0_i32_0 : i32, i32
  }
  func.func @transform_7(%arg0: i32) -> (i32, i32) {
    %c0_i32 = arith.constant 0 : i32
    %c0_i32_0 = arith.constant 0 : i32
    return %arg0, %c0_i32 : i32, i32
  }
  func.func @transform_8(%arg0: i32) -> (i32, i32) {
    %c0_i32 = arith.constant 0 : i32
    %c0_i32_0 = arith.constant 0 : i32
    return %arg0, %c0_i32 : i32, i32
  }
}

</mosaic_0001>

<llo_original>
// kernel: tpu_custom_call.1
$region0: #{tpu_custom_call.1}
  #allocation0 [shape = 'u32[]', space=smem, size = 0x4, offset = 0x4, fixed_abs, tag = 'smem constant byte address 0x4 - core index']
  #allocation1 [shape = 'u32[72,128]{1,0:T(1,128)}', space=vmem, size = 0x9000, scoped, tag = 'internal scratch']
  %s0 = inlined_call_operand.hbm [shape: bf16[32,256], index: 0, kind: input, shape index: {}]
  %s1 = inlined_call_operand.hbm [shape: bf16[256,128], index: 1, kind: input, shape index: {}]
  %s2 = inlined_call_operand.vmem [shape: bf16[1,128], index: 2, kind: input, shape index: {}]
  %s3 = inlined_call_operand.hbm [shape: bf16[128,128], index: 3, kind: input, shape index: {}]
  %s4 = inlined_call_operand.vmem [shape: bf16[1,128], index: 4, kind: input, shape index: {}]
  %s5 = inlined_call_operand.hbm [shape: bf16[128,128], index: 5, kind: input, shape index: {}]
  %s6 = inlined_call_operand.vmem [shape: bf16[1,128], index: 6, kind: input, shape index: {}]
  %s7 = inlined_call_operand.hbm [shape: bf16[32,128], index: 7, kind: output, shape index: {0}]
  %s8 = inlined_call_operand.hbm [shape: bf16[32,128], index: 8, kind: output, shape index: {1}]
  %9 = xla_tuple %s7, %s8
  %s10 = sld [smem:[#allocation0]]
  $region85: #{tpu_custom_call.1} parent=0
    _
  %s12 = ssub.s32 1, %s10
  %s13 = scalar_select 0, %s12, %s10
  $region1: #{tpu_custom_call.1} parent=0
    #allocation2 [shape = 'u8[16384]{0}', space=vmem, size = 0x4000, scoped, tag = 'input window, operand 0']
    #allocation3 [shape = 's32[2]{0}', space=sflag, size = 0x8, scoped, tag = 'scoped memory for tpu_custom_call.1']
    #allocation4 [shape = 's32[2]{0}', space=sflag, size = 0x8, scoped, tag = 'scoped memory for tpu_custom_call.1']
    #allocation5 [shape = 'u8[65536]{0}', space=vmem, size = 0x10000, scoped, tag = 'input window, operand 1, single buffered']
    #allocation6 [shape = 's32[1]{0}', space=sflag, size = 0x4, scoped, tag = 'scoped memory for tpu_custom_call.1']
    #allocation7 [shape = 'u8[32768]{0}', space=vmem, size = 0x8000, scoped, tag = 'input window, operand 3, single buffered']
    #allocation8 [shape = 'u8[32768]{0}', space=vmem, size = 0x8000, scoped, tag = 'input window, operand 5, single buffered']
    #allocation9 [shape = 's32[1]{0}', space=sflag, size = 0x4, scoped, tag = 'scoped memory for tpu_custom_call.1']
    #allocation10 [shape = 'u8[8192]{0}', space=vmem, size = 0x2000, scoped, tag = 'output window, operand 0']
    #allocation11 [shape = 'u8[8192]{0}', space=vmem, size = 0x2000, scoped, tag = 'output window, operand 1']
    #allocation12 [shape = 's32[2]{0}', space=sflag, size = 0x8, scoped, tag = 'scoped memory for tpu_custom_call.1']
    %14 = vsyncpa [#allocation3], 0
    %s15 = scalar_lea.sflag [#allocation3], 1
    %16 = vsyncpa %s15, 0
    %17 = vsyncpa [#allocation6], 0
    %18 = vsyncpa [#allocation9], 0
    %19 = vsyncpa [#allocation4], 0
    %s20 = scalar_lea.sflag [#allocation4], 1
    %21 = vsyncpa %s20, 0
    %22 = vsyncpa [#allocation12], 0
    %s23 = scalar_lea.sflag [#allocation12], 1
    %24 = vsyncpa %s23, 0
    loop: start=0, step=1, limit=4
    $region2: #{tpu_custom_call.1} parent=1 // loop_pre_header
      _
    $region3: #{tpu_custom_call.1} parent=1 // loop_header
      %s26 = sphi 0, %s30
      %p27 = scmp.ge.s32.totalorder %s26, 4
      %s36 = sphi 0, %s38
      %s39 = sphi 0, %s36
      %s40 = sphi 0, %s39
      %s56 = sphi 0, %s40
      %s60 = sphi 0, %s60
      %s62 = sphi 0, %s60
      %s63 = sphi 0, %s62
      %s77 = sphi 0, %s63
      %s81 = sphi 0, %s81
      %s83 = sphi 0, %s81
      %s84 = sphi 0, %s83
      %s98 = sphi 0, %s84
      %s102 = sphi 0, %s102
      %s104 = sphi 0, %s102
      %s105 = sphi 0, %s104
      %s119 = sphi 0, %s105
      %s123 = sphi 0, %s123
      %s125 = sphi 0, %s123
      %s126 = sphi 0, %s125
      %s140 = sphi 0, %s126
      %s144 = sphi 0, %s144
      %s146 = sphi 0, %s144
      %s147 = sphi 0, %s146
      %s161 = sphi 0, %s147
      %s165 = sphi 0, %s165
      %s167 = sphi 0, %s165
      %s168 = sphi 0, %s167
      %s182 = sphi 0, %s168
      %s188 = sphi 0, %s190
      %s191 = sphi 0, %s188
      %s192 = sphi 0, %s191
      %s208 = sphi 0, %s192
      %s214 = sphi 0, %s216
      %s217 = sphi 0, %s214
      %s218 = sphi 0, %s217
      %s234 = sphi 0, %s218
    $region4: #{tpu_custom_call.1} parent=1 // loop_header_branch
      %29 = sbr.rel (%p27) target = $region8
    $region5: #{tpu_custom_call.1} parent=1 // loop_body
      %s31 = ssub.s32 %s26, 1
      %s32 = ssub.s32 %s26, 2
      %s33 = sadd.s32 %s26, 1
      %s34 = ssub.s32 %s26, %s33
      %p35 = scmp.eq.s32.totalorder %s34, 0
      %s37 = sadd.s32 %s36, 1
      %s38 = scalar_select %p35, %s36, %s37
      %p41 = pneg %p35
      %p42 = scmp.eq.s32.totalorder %s26, 1
      %p43 = por %p41, %p42
      %p44 = scmp.ne.s32.totalorder %s36, %s39
      %p45 = scmp.eq.s32.totalorder %s26, 0
      %p46 = por %p44, %p45
      %p47 = scmp.ne.s32.totalorder %s36, %s39
      %p48 = scmp.eq.s32.totalorder %s31, 1
      %p49 = por %p47, %p48
      %p50 = scmp.ne.s32.totalorder %s39, %s40
      %p51 = scmp.eq.s32.totalorder %s31, 0
      %p52 = por %p50, %p51
      %p53 = scmp.ne.s32.totalorder %s39, %s40
      %p54 = scmp.eq.s32.totalorder %s32, 1
      %p55 = por %p53, %p54
      %p57 = scmp.ne.s32.totalorder %s40, %s56
      %p58 = scmp.eq.s32.totalorder %s32, 0
      %p59 = por %p57, %p58
      %s61 = sadd.s32 %s60, 1
      %p64 = scmp.eq.s32.totalorder %s26, 1
      %p65 = scmp.ne.s32.totalorder %s60, %s62
      %p66 = scmp.eq.s32.totalorder %s26, 0
      %p67 = por %p65, %p66
      %p68 = scmp.ne.s32.totalorder %s60, %s62
      %p69 = scmp.eq.s32.totalorder %s31, 1
      %p70 = por %p68, %p69
      %p71 = scmp.ne.s32.totalorder %s62, %s63
      %p72 = scmp.eq.s32.totalorder %s31, 0
      %p73 = por %p71, %p72
      %p74 = scmp.ne.s32.totalorder %s62, %s63
      %p75 = scmp.eq.s32.totalorder %s32, 1
      %p76 = por %p74, %p75
      %p78 = scmp.ne.s32.totalorder %s63, %s77
      %p79 = scmp.eq.s32.totalorder %s32, 0
      %p80 = por %p78, %p79
      %s82 = sadd.s32 %s81, 1
      %p85 = scmp.eq.s32.totalorder %s26, 1
      %p86 = scmp.ne.s32.totalorder %s81, %s83
      %p87 = scmp.eq.s32.totalorder %s26, 0
      %p88 = por %p86, %p87
      %p89 = scmp.ne.s32.totalorder %s81, %s83
      %p90 = scmp.eq.s32.totalorder %s31, 1
      %p91 = por %p89, %p90
      %p92 = scmp.ne.s32.totalorder %s83, %s84
      %p93 = scmp.eq.s32.totalorder %s31, 0
      %p94 = por %p92, %p93
      %p95 = scmp.ne.s32.totalorder %s83, %s84
      %p96 = scmp.eq.s32.totalorder %s32, 1
      %p97 = por %p95, %p96
      %p99 = scmp.ne.s32.totalorder %s84, %s98
      %p100 = scmp.eq.s32.totalorder %s32, 0
      %p101 = por %p99, %p100
      %s103 = sadd.s32 %s102, 1
      %p106 = scmp.eq.s32.totalorder %s26, 1
      %p107 = scmp.ne.s32.totalorder %s102, %s104
      %p108 = scmp.eq.s32.totalorder %s26, 0
      %p109 = por %p107, %p108
      %p110 = scmp.ne.s32.totalorder %s102, %s104
      %p111 = scmp.eq.s32.totalorder %s31, 1
      %p112 = por %p110, %p111
      %p113 = scmp.ne.s32.totalorder %s104, %s105
      %p114 = scmp.eq.s32.totalorder %s31, 0
      %p115 = por %p113, %p114
      %p116 = scmp.ne.s32.totalorder %s104, %s105
      %p117 = scmp.eq.s32.totalorder %s32, 1
      %p118 = por %p116, %p117
      %p120 = scmp.ne.s32.totalorder %s105, %s119
      %p121 = scmp.eq.s32.totalorder %s32, 0
      %p122 = por %p120, %p121
      %s124 = sadd.s32 %s123, 1
      %p127 = scmp.eq.s32.totalorder %s26, 1
      %p128 = scmp.ne.s32.totalorder %s123, %s125
      %p129 = scmp.eq.s32.totalorder %s26, 0
      %p130 = por %p128, %p129
      %p131 = scmp.ne.s32.totalorder %s123, %s125
      %p132 = scmp.eq.s32.totalorder %s31, 1
      %p133 = por %p131, %p132
      %p134 = scmp.ne.s32.totalorder %s125, %s126
      %p135 = scmp.eq.s32.totalorder %s31, 0
      %p136 = por %p134, %p135
      %p137 = scmp.ne.s32.totalorder %s125, %s126
      %p138 = scmp.eq.s32.totalorder %s32, 1
      %p139 = por %p137, %p138
      %p141 = scmp.ne.s32.totalorder %s126, %s140
      %p142 = scmp.eq.s32.totalorder %s32, 0
      %p143 = por %p141, %p142
      %s145 = sadd.s32 %s144, 1
      %p148 = scmp.eq.s32.totalorder %s26, 1
      %p149 = scmp.ne.s32.totalorder %s144, %s146
      %p150 = scmp.eq.s32.totalorder %s26, 0
      %p151 = por %p149, %p150
      %p152 = scmp.ne.s32.totalorder %s144, %s146
      %p153 = scmp.eq.s32.totalorder %s31, 1
      %p154 = por %p152, %p153
      %p155 = scmp.ne.s32.totalorder %s146, %s147
      %p156 = scmp.eq.s32.totalorder %s31, 0
      %p157 = por %p155, %p156
      %p158 = scmp.ne.s32.totalorder %s146, %s147
      %p159 = scmp.eq.s32.totalorder %s32, 1
      %p160 = por %p158, %p159
      %p162 = scmp.ne.s32.totalorder %s147, %s161
      %p163 = scmp.eq.s32.totalorder %s32, 0
      %p164 = por %p162, %p163
      %s166 = sadd.s32 %s165, 1
      %p169 = scmp.eq.s32.totalorder %s26, 1
      %p170 = scmp.ne.s32.totalorder %s165, %s167
      %p171 = scmp.eq.s32.totalorder %s26, 0
      %p172 = por %p170, %p171
      %p173 = scmp.ne.s32.totalorder %s165, %s167
      %p174 = scmp.eq.s32.totalorder %s31, 1
      %p175 = por %p173, %p174
      %p176 = scmp.ne.s32.totalorder %s167, %s168
      %p177 = scmp.eq.s32.totalorder %s31, 0
      %p178 = por %p176, %p177
      %p179 = scmp.ne.s32.totalorder %s167, %s168
      %p180 = scmp.eq.s32.totalorder %s32, 1
      %p181 = por %p179, %p180
      %p183 = scmp.ne.s32.totalorder %s168, %s182
      %p184 = scmp.eq.s32.totalorder %s32, 0
      %p185 = por %p183, %p184
      %s186 = ssub.s32 %s26, %s33
      %p187 = scmp.eq.s32.totalorder %s186, 0
      %s189 = sadd.s32 %s188, 1
      %s190 = scalar_select %p187, %s188, %s189
      %p193 = pneg %p187
      %p194 = scmp.eq.s32.totalorder %s26, 1
      %p195 = por %p193, %p194
      %p196 = scmp.ne.s32.totalorder %s188, %s191
      %p197 = scmp.eq.s32.totalorder %s26, 0
      %p198 = por %p196, %p197
      %p199 = scmp.ne.s32.totalorder %s188, %s191
      %p200 = scmp.eq.s32.totalorder %s31, 1
      %p201 = por %p199, %p200
      %p202 = scmp.ne.s32.totalorder %s191, %s192
      %p203 = scmp.eq.s32.totalorder %s31, 0
      %p204 = por %p202, %p203
      %p205 = scmp.ne.s32.totalorder %s191, %s192
      %p206 = scmp.eq.s32.totalorder %s32, 1
      %p207 = por %p205, %p206
      %p209 = scmp.ne.s32.totalorder %s192, %s208
      %p210 = scmp.eq.s32.totalorder %s32, 0
      %p211 = por %p209, %p210
      %s212 = ssub.s32 %s26, %s33
      %p213 = scmp.eq.s32.totalorder %s212, 0
      %s215 = sadd.s32 %s214, 1
      %s216 = scalar_select %p213, %s214, %s215
      %p219 = pneg %p213
      %p220 = scmp.eq.s32.totalorder %s26, 1
      %p221 = por %p219, %p220
      %p222 = scmp.ne.s32.totalorder %s214, %s217
      %p223 = scmp.eq.s32.totalorder %s26, 0
      %p224 = por %p222, %p223
      %p225 = scmp.ne.s32.totalorder %s214, %s217
      %p226 = scmp.eq.s32.totalorder %s31, 1
      %p227 = por %p225, %p226
      %p228 = scmp.ne.s32.totalorder %s217, %s218
      %p229 = scmp.eq.s32.totalorder %s31, 0
      %p230 = por %p228, %p229
      %p231 = scmp.ne.s32.totalorder %s217, %s218
      %p232 = scmp.eq.s32.totalorder %s32, 1
      %p233 = por %p231, %p232
      %p235 = scmp.ne.s32.totalorder %s218, %s234
      %p236 = scmp.eq.s32.totalorder %s32, 0
      %p237 = por %p235, %p236
      %p238 = scmp.le.s32.totalorder 1, %s26
      %p239 = scmp.lt.s32.totalorder %s26, 3
      %p240 = pnand %p238, %p239
      %p241 = pneg %p240
      // Predicated region
      $region9: #{tpu_custom_call.1} parent=5 // pred_check
        _
      $region10: #{tpu_custom_call.1} parent=5 // pred_check_branch
        %243 = sbr.rel (%p240) target = $region12
      $region11: #{tpu_custom_call.1} parent=5 // pred_region
        %s244 = ssub.s32 %s26, 1
        // Predicated region
        $region13: #{tpu_custom_call.1} parent=11 // pred_check
          %p245 = pneg %p73
        $region14: #{tpu_custom_call.1} parent=11 // pred_check_branch
          %247 = sbr.rel (%p245) target = $region16
        $region15: #{tpu_custom_call.1} parent=11 // pred_region
          %249 = vsyncadd [#allocation6], 0
          %s250 = sshll.u32 %s1, 4
          %s251 = int_to_ptr.hbm [resolvable:$true] %s250
          %s252 = sshll.u32 [#allocation5], 4
          %s253 = int_to_ptr.vmem [resolvable:$true] %s252
          %258 = dma.hbm_to_vmem [thread:$0]  %s251, 2048, %s253, [#allocation6], 64, 64, 4
        $region16: #{tpu_custom_call.1} parent=11 // pred_fallthru
          _
        // Predicated region
        $region17: #{tpu_custom_call.1} parent=11 // pred_check
          %p259 = pneg %p94
        $region18: #{tpu_custom_call.1} parent=11 // pred_check_branch
          %261 = sbr.rel (%p259) target = $region20
        $region19: #{tpu_custom_call.1} parent=11 // pred_region
          _
        $region20: #{tpu_custom_call.1} parent=11 // pred_fallthru
          _
        // Predicated region
        $region21: #{tpu_custom_call.1} parent=11 // pred_check
          %p262 = pneg %p115
        $region22: #{tpu_custom_call.1} parent=11 // pred_check_branch
          %264 = sbr.rel (%p262) target = $region24
        $region23: #{tpu_custom_call.1} parent=11 // pred_region
          %266 = vsyncadd [#allocation6], 0
          %s267 = sshll.u32 %s3, 4
          %s268 = int_to_ptr.hbm [resolvable:$true] %s267
          %s269 = sshll.u32 [#allocation7], 4
          %s270 = int_to_ptr.vmem [resolvable:$true] %s269
          %275 = dma.hbm_to_vmem [thread:$0]  %s268, 1024, %s270, [#allocation6], 64, 64, 4
        $region24: #{tpu_custom_call.1} parent=11 // pred_fallthru
          _
        // Predicated region
        $region25: #{tpu_custom_call.1} parent=11 // pred_check
          %p276 = pneg %p136
        $region26: #{tpu_custom_call.1} parent=11 // pred_check_branch
          %278 = sbr.rel (%p276) target = $region28
        $region27: #{tpu_custom_call.1} parent=11 // pred_region
          _
        $region28: #{tpu_custom_call.1} parent=11 // pred_fallthru
          _
        // Predicated region
        $region29: #{tpu_custom_call.1} parent=11 // pred_check
          %p279 = pneg %p157
        $region30: #{tpu_custom_call.1} parent=11 // pred_check_branch
          %281 = sbr.rel (%p279) target = $region32
        $region31: #{tpu_custom_call.1} parent=11 // pred_region
          %283 = vsyncadd [#allocation9], 0
          %s284 = sshll.u32 %s5, 4
          %s285 = int_to_ptr.hbm [resolvable:$true] %s284
          %s286 = sshll.u32 [#allocation8], 4
          %s287 = int_to_ptr.vmem [resolvable:$true] %s286
          %292 = dma.hbm_to_vmem [thread:$0]  %s285, 1024, %s287, [#allocation9], 64, 64, 4
        $region32: #{tpu_custom_call.1} parent=11 // pred_fallthru
          _
        // Predicated region
        $region33: #{tpu_custom_call.1} parent=11 // pred_check
          %p293 = pneg %p178
        $region34: #{tpu_custom_call.1} parent=11 // pred_check_branch
          %295 = sbr.rel (%p293) target = $region36
        $region35: #{tpu_custom_call.1} parent=11 // pred_region
          _
        $region36: #{tpu_custom_call.1} parent=11 // pred_fallthru
          _
      $region12: #{tpu_custom_call.1} parent=5 // pred_fallthru
        _
      %p296 = scmp.lt.s32.totalorder %s26, 2
      // Predicated region
      $region37: #{tpu_custom_call.1} parent=5 // pred_check
        %p297 = pneg %p296
      $region38: #{tpu_custom_call.1} parent=5 // pred_check_branch
        %299 = sbr.rel (%p297) target = $region40
      $region39: #{tpu_custom_call.1} parent=5 // pred_region
        // Predicated region
        $region41: #{tpu_custom_call.1} parent=39 // pred_check
          %p300 = pneg %p46
        $region42: #{tpu_custom_call.1} parent=39 // pred_check_branch
          %302 = sbr.rel (%p300) target = $region44
        $region43: #{tpu_custom_call.1} parent=39 // pred_region
          %s303 = sand.u32 %s36, 1
          %s304 = scalar_lea.sflag [#allocation3], %s303
          %s305 = sand.u32 %s36, 1
          %s306 = smul.addr %s305, 16
          %s307 = scalar_lea.vmem [#allocation2], %s306
          %s308 = smul.u32 2, %s26
          %310 = vsyncadd %s304, 0
          %s311 = smul.addr %s308, 2
          %s312 = smul.addr %s311, 4
          %s313 = scalar_lea.hbm %s0, %s312
          %s314 = sshll.u32 %s313, 4
          %s315 = int_to_ptr.hbm [resolvable:$true] %s314
          %s316 = sshll.u32 %s307, 4
          %s317 = int_to_ptr.vmem [resolvable:$true] %s316
          %322 = dma.hbm_to_vmem [thread:$0]  %s315, 256, %s317, %s304, 128, 128, 8
        $region44: #{tpu_custom_call.1} parent=39 // pred_fallthru
          _
      $region40: #{tpu_custom_call.1} parent=5 // pred_fallthru
        _
      %p323 = scmp.le.s32.totalorder 1, %s26
      %p324 = scmp.lt.s32.totalorder %s26, 3
      %p325 = pnand %p323, %p324
      %p326 = pneg %p325
      // Predicated region
      $region45: #{tpu_custom_call.1} parent=5 // pred_check
        _
      $region46: #{tpu_custom_call.1} parent=5 // pred_check_branch
        %328 = sbr.rel (%p325) target = $region48
      $region47: #{tpu_custom_call.1} parent=5 // pred_region
        %s329 = ssub.s32 %s26, 1
        %s330 = sand.u32 %s39, 1
        %s331 = scalar_lea.sflag [#allocation3], %s330
        %s332 = sand.u32 %s39, 1
        %s333 = smul.addr %s332, 16
        %s334 = scalar_lea.vmem [#allocation2], %s333
        // Predicated region
        $region49: #{tpu_custom_call.1} parent=47 // pred_check
          %p335 = pneg %p52
        $region50: #{tpu_custom_call.1} parent=47 // pred_check_branch
          %337 = sbr.rel (%p335) target = $region52
        $region51: #{tpu_custom_call.1} parent=47 // pred_region
          %339 = dma.done %s331, 256
        $region52: #{tpu_custom_call.1} parent=47 // pred_fallthru
          _
        // Predicated region
        $region53: #{tpu_custom_call.1} parent=47 // pred_check
          %p340 = pneg %p73
        $region54: #{tpu_custom_call.1} parent=47 // pred_check_branch
          %342 = sbr.rel (%p340) target = $region56
        $region55: #{tpu_custom_call.1} parent=47 // pred_region
          %344 = dma.done [#allocation6], 2048
        $region56: #{tpu_custom_call.1} parent=47 // pred_fallthru
          _
        // Predicated region
        $region57: #{tpu_custom_call.1} parent=47 // pred_check
          %p345 = pneg %p115
        $region58: #{tpu_custom_call.1} parent=47 // pred_check_branch
          %347 = sbr.rel (%p345) target = $region60
        $region59: #{tpu_custom_call.1} parent=47 // pred_region
          %349 = dma.done [#allocation6], 1024
        $region60: #{tpu_custom_call.1} parent=47 // pred_fallthru
          _
        // Predicated region
        $region61: #{tpu_custom_call.1} parent=47 // pred_check
          %p350 = pneg %p157
        $region62: #{tpu_custom_call.1} parent=47 // pred_check_branch
          %352 = sbr.rel (%p350) target = $region64
        $region63: #{tpu_custom_call.1} parent=47 // pred_region
          %354 = dma.done [#allocation9], 1024
        $region64: #{tpu_custom_call.1} parent=47 // pred_fallthru
          _
        %s355 = sand.u32 %s39, 1
        %s356 = scalar_lea.sflag [#allocation3], %s355
        %s357 = sand.u32 %s39, 1
        %s358 = smul.addr %s357, 16
        %s359 = scalar_lea.vmem [#allocation2], %s358
        %p360 = pneg %p52
        %p361 = pneg %p49
        %p362 = pneg %p73
        %p363 = pneg %p70
        %p364 = pneg %p94
        %p365 = pneg %p91
        %p366 = pneg %p115
        %p367 = pneg %p112
        %p368 = pneg %p136
        %p369 = pneg %p133
        %p370 = pneg %p157
        %p371 = pneg %p154
        %p372 = pneg %p178
        %p373 = pneg %p175
        %p374 = pneg %p204
        %p375 = pneg %p201
        %s376 = sand.u32 %s191, 1
        %s377 = scalar_lea.sflag [#allocation4], %s376
        %s378 = sand.u32 %s191, 1
        %s379 = smul.addr %s378, 8
        %s380 = scalar_lea.vmem [#allocation10], %s379
        %p381 = pneg %p230
        %p382 = pneg %p227
        %s383 = sand.u32 %s217, 1
        %s384 = scalar_lea.sflag [#allocation12], %s383
        %s385 = sand.u32 %s217, 1
        %s386 = smul.addr %s385, 8
        %s387 = scalar_lea.vmem [#allocation11], %s386
        %s388 = smul.u32 2, %s31
        %s389 = smul.u32 2, %s31
        %s390 = smul.u32 2, %s31
        %v391 = vld [vmem:[%s334] sm:$0xff]
        %v392 = vld [vmem:[%s334 + $0x8] sm:$0xff]
        %v393 = vld [vmem:[#allocation5] sm:$0xf]
        %v394 = vld [vmem:[#allocation5 + $0x4] sm:$0xf]
        %v395 = vld [vmem:[#allocation5 + $0x8] sm:$0xf]
        %v396 = vld [vmem:[#allocation5 + $0xc] sm:$0xf]
        %v397 = vld [vmem:[#allocation5 + $0x10] sm:$0xf]
        %v398 = vld [vmem:[#allocation5 + $0x14] sm:$0xf]
        %v399 = vld [vmem:[#allocation5 + $0x18] sm:$0xf]
        %v400 = vld [vmem:[#allocation5 + $0x1c] sm:$0xf]
        %v401 = vld [vmem:[#allocation5 + $0x20] sm:$0xf]
        %v402 = vld [vmem:[#allocation5 + $0x24] sm:$0xf]
        %v403 = vld [vmem:[#allocation5 + $0x28] sm:$0xf]
        %v404 = vld [vmem:[#allocation5 + $0x2c] sm:$0xf]
        %v405 = vld [vmem:[#allocation5 + $0x30] sm:$0xf]
        %v406 = vld [vmem:[#allocation5 + $0x34] sm:$0xf]
        %v407 = vld [vmem:[#allocation5 + $0x38] sm:$0xf]
        %v408 = vld [vmem:[#allocation5 + $0x3c] sm:$0xf]
        %v409 = vld [vmem:[#allocation5 + $0x40] sm:$0xf]
        %v410 = vld [vmem:[#allocation5 + $0x44] sm:$0xf]
        %v411 = vld [vmem:[#allocation5 + $0x48] sm:$0xf]
        %v412 = vld [vmem:[#allocation5 + $0x4c] sm:$0xf]
        %v413 = vld [vmem:[#allocation5 + $0x50] sm:$0xf]
        %v414 = vld [vmem:[#allocation5 + $0x54] sm:$0xf]
        %v415 = vld [vmem:[#allocation5 + $0x58] sm:$0xf]
        %v416 = vld [vmem:[#allocation5 + $0x5c] sm:$0xf]
        %v417 = vld [vmem:[#allocation5 + $0x60] sm:$0xf]
        %v418 = vld [vmem:[#allocation5 + $0x64] sm:$0xf]
        %v419 = vld [vmem:[#allocation5 + $0x68] sm:$0xf]
        %v420 = vld [vmem:[#allocation5 + $0x6c] sm:$0xf]
        %v421 = vld [vmem:[#allocation5 + $0x70] sm:$0xf]
        %v422 = vld [vmem:[#allocation5 + $0x74] sm:$0xf]
        %v423 = vld [vmem:[#allocation5 + $0x78] sm:$0xf]
        %v424 = vld [vmem:[#allocation5 + $0x7c] sm:$0xf]
        %v427 = vunpack.c.l.b16 %v391
        %v428 = vunpack.c.h.b16 %v391
        %v429 = vunpack.c.l.b16 %v392
        %v430 = vunpack.c.h.b16 %v392
        %v431 = vpack.c.b16 %v429, %v427
        %v432 = vpack.c.b16 %v430, %v428
        %v467 = vunpack.c.l.b16 %v393
        %v468 = vunpack.c.l.b16 %v394
        %v469 = vunpack.c.l.b16 %v395
        %v470 = vunpack.c.l.b16 %v396
        %v471 = vunpack.c.l.b16 %v397
        %v472 = vunpack.c.l.b16 %v398
        %v473 = vunpack.c.l.b16 %v399
        %v474 = vunpack.c.l.b16 %v400
        %v475 = vunpack.c.l.b16 %v401
        %v476 = vunpack.c.l.b16 %v402
        %v477 = vunpack.c.l.b16 %v403
        %v478 = vunpack.c.l.b16 %v404
        %v479 = vunpack.c.l.b16 %v405
        %v480 = vunpack.c.l.b16 %v406
        %v481 = vunpack.c.l.b16 %v407
        %v482 = vunpack.c.l.b16 %v408
        %v483 = vunpack.c.l.b16 %v409
        %v484 = vunpack.c.l.b16 %v410
        %v485 = vunpack.c.l.b16 %v411
        %v486 = vunpack.c.l.b16 %v412
        %v487 = vunpack.c.l.b16 %v413
        %v488 = vunpack.c.l.b16 %v414
        %v489 = vunpack.c.l.b16 %v415
        %v490 = vunpack.c.l.b16 %v416
        %v491 = vunpack.c.l.b16 %v417
        %v492 = vunpack.c.l.b16 %v418
        %v493 = vunpack.c.l.b16 %v419
        %v494 = vunpack.c.l.b16 %v420
        %v495 = vunpack.c.l.b16 %v421
        %v496 = vunpack.c.l.b16 %v422
        %v497 = vunpack.c.l.b16 %v423
        %v498 = vunpack.c.l.b16 %v424
        %v499 = vpack.c.b16 %v468, %v467
        %v500 = vpack.c.b16 %v470, %v469
        %v501 = vpack.c.b16 %v472, %v471
        %v502 = vpack.c.b16 %v474, %v473
        %v503 = vpack.c.b16 %v476, %v475
        %v504 = vpack.c.b16 %v478, %v477
        %v505 = vpack.c.b16 %v480, %v479
        %v506 = vpack.c.b16 %v482, %v481
        %v507 = vpack.c.b16 %v484, %v483
        %v508 = vpack.c.b16 %v486, %v485
        %v509 = vpack.c.b16 %v488, %v487
        %v510 = vpack.c.b16 %v490, %v489
        %v511 = vpack.c.b16 %v492, %v491
        %v512 = vpack.c.b16 %v494, %v493
        %v513 = vpack.c.b16 %v496, %v495
        %v514 = vpack.c.b16 %v498, %v497
        %531 = vmatpush.bf16.msra.mxu0 %v506
        %532 = vmatpush.bf16.msra.mxu0 %v505
        %533 = vmatpush.bf16.msra.mxu0 %v504
        %534 = vmatpush.bf16.msra.mxu0 %v503
        %535 = vmatpush.bf16.msra.mxu0 %v502
        %536 = vmatpush.bf16.msra.mxu0 %v501
        %537 = vmatpush.bf16.msra.mxu0 %v500
        %538 = vmatpush.bf16.msra.mxu0 %v499
        %539 = vmatmul.bf16.gmra.mxu0 %v431
        %v540 = vpop.f32.mrf.mxu0
        %v541 = vadd.f32 0.0, %v540
        %v542 = vpop.f32.mrf.mxu0
        %v543 = vadd.f32 0.0, %v542
        %544 = vdwg.mxu0
        %545 = vmatpush.bf16.msra.mxu0 %v514
        %546 = vmatpush.bf16.msra.mxu0 %v513
        %547 = vmatpush.bf16.msra.mxu0 %v512
        %548 = vmatpush.bf16.msra.mxu0 %v511
        %549 = vmatpush.bf16.msra.mxu0 %v510
        %550 = vmatpush.bf16.msra.mxu0 %v509
        %551 = vmatpush.bf16.msra.mxu0 %v508
        %552 = vmatpush.bf16.msra.mxu0 %v507
        %553 = vmatmul.bf16.gmra.mxu0 %v432
        %v554 = vpop.f32.mrf.mxu0
        %v555 = vadd.f32 %v541, %v554
        %v556 = vpop.f32.mrf.mxu0
        %v557 = vadd.f32 %v543, %v556
        %558 = vdwg.mxu0
        %v559 = vpack.c.bf16 %v555, %v555
        %v560 = vpack.c.bf16 %v557, %v557
        %v561 = vld [vmem:[%s2] sm:$0x1]
        %v563 = vpack.i.b16 %v561, %v561
        %v565 = vperm.slane %v563, 0
        %v566 = vunpack.c.l.bf16 %v559
        %v567 = vunpack.c.l.bf16 %v560
        %v568 = vunpack.c.l.bf16 %v565
        %v569 = vadd.f32 %v566, %v568
        %v570 = vadd.f32 %v567, %v568
        %v571 = vpack.c.bf16 %v569, %v569
        %v572 = vpack.c.bf16 %v570, %v570
        %v573 = vld [vmem:[#allocation7] sm:$0xf]
        %v574 = vld [vmem:[#allocation7 + $0x4] sm:$0xf]
        %v575 = vld [vmem:[#allocation7 + $0x8] sm:$0xf]
        %v576 = vld [vmem:[#allocation7 + $0xc] sm:$0xf]
        %v577 = vld [vmem:[#allocation7 + $0x10] sm:$0xf]
        %v578 = vld [vmem:[#allocation7 + $0x14] sm:$0xf]
        %v579 = vld [vmem:[#allocation7 + $0x18] sm:$0xf]
        %v580 = vld [vmem:[#allocation7 + $0x1c] sm:$0xf]
        %v581 = vld [vmem:[#allocation7 + $0x20] sm:$0xf]
        %v582 = vld [vmem:[#allocation7 + $0x24] sm:$0xf]
        %v583 = vld [vmem:[#allocation7 + $0x28] sm:$0xf]
        %v584 = vld [vmem:[#allocation7 + $0x2c] sm:$0xf]
        %v585 = vld [vmem:[#allocation7 + $0x30] sm:$0xf]
        %v586 = vld [vmem:[#allocation7 + $0x34] sm:$0xf]
        %v587 = vld [vmem:[#allocation7 + $0x38] sm:$0xf]
        %v588 = vld [vmem:[#allocation7 + $0x3c] sm:$0xf]
        %v591 = vunpack.c.l.b16 %v571
        %v592 = vunpack.c.l.b16 %v572
        %v593 = vpack.c.b16 %v592, %v591
        %v611 = vunpack.c.l.b16 %v573
        %v612 = vunpack.c.l.b16 %v574
        %v613 = vunpack.c.l.b16 %v575
        %v614 = vunpack.c.l.b16 %v576
        %v615 = vunpack.c.l.b16 %v577
        %v616 = vunpack.c.l.b16 %v578
        %v617 = vunpack.c.l.b16 %v579
        %v618 = vunpack.c.l.b16 %v580
        %v619 = vunpack.c.l.b16 %v581
        %v620 = vunpack.c.l.b16 %v582
        %v621 = vunpack.c.l.b16 %v583
        %v622 = vunpack.c.l.b16 %v584
        %v623 = vunpack.c.l.b16 %v585
        %v624 = vunpack.c.l.b16 %v586
        %v625 = vunpack.c.l.b16 %v587
        %v626 = vunpack.c.l.b16 %v588
        %v627 = vpack.c.b16 %v612, %v611
        %v628 = vpack.c.b16 %v614, %v613
        %v629 = vpack.c.b16 %v616, %v615
        %v630 = vpack.c.b16 %v618, %v617
        %v631 = vpack.c.b16 %v620, %v619
        %v632 = vpack.c.b16 %v622, %v621
        %v633 = vpack.c.b16 %v624, %v623
        %v634 = vpack.c.b16 %v626, %v625
        %643 = vmatpush.bf16.msra.mxu0 %v634
        %644 = vmatpush.bf16.msra.mxu0 %v633
        %645 = vmatpush.bf16.msra.mxu0 %v632
        %646 = vmatpush.bf16.msra.mxu0 %v631
        %647 = vmatpush.bf16.msra.mxu0 %v630
        %648 = vmatpush.bf16.msra.mxu0 %v629
        %649 = vmatpush.bf16.msra.mxu0 %v628
        %650 = vmatpush.bf16.msra.mxu0 %v627
        %651 = vmatmul.bf16.gmra.mxu0 %v593
        %v652 = vpop.f32.mrf.mxu0
        %v653 = vadd.f32 0.0, %v652
        %v654 = vpop.f32.mrf.mxu0
        %v655 = vadd.f32 0.0, %v654
        %656 = vdwg.mxu0
        %v657 = vpack.c.bf16 %v653, %v653
        %v658 = vpack.c.bf16 %v655, %v655
        %v659 = vld [vmem:[%s4] sm:$0x1]
        %v661 = vpack.i.b16 %v659, %v659
        %v663 = vperm.slane %v661, 0
        %v664 = vunpack.c.l.bf16 %v657
        %v665 = vunpack.c.l.bf16 %v658
        %v666 = vunpack.c.l.bf16 %v663
        %v667 = vadd.f32 %v664, %v666
        %v668 = vadd.f32 %v665, %v666
        %v669 = vpack.c.bf16 %v667, %v667
        %v670 = vpack.c.bf16 %v668, %v668
        %v671 = vunpack.c.l.bf16 %v669
        %v672 = vunpack.c.l.bf16 %v670
        %v673 = vmax.f32 %v671, 0.0
        %v674 = vmax.f32 %v672, 0.0
        %v675 = vpack.c.bf16 %v674, %v673
        %v676 = vld [vmem:[#allocation8] sm:$0xf]
        %v677 = vld [vmem:[#allocation8 + $0x4] sm:$0xf]
        %v678 = vld [vmem:[#allocation8 + $0x8] sm:$0xf]
        %v679 = vld [vmem:[#allocation8 + $0xc] sm:$0xf]
        %v680 = vld [vmem:[#allocation8 + $0x10] sm:$0xf]
        %v681 = vld [vmem:[#allocation8 + $0x14] sm:$0xf]
        %v682 = vld [vmem:[#allocation8 + $0x18] sm:$0xf]
        %v683 = vld [vmem:[#allocation8 + $0x1c] sm:$0xf]
        %v684 = vld [vmem:[#allocation8 + $0x20] sm:$0xf]
        %v685 = vld [vmem:[#allocation8 + $0x24] sm:$0xf]
        %v686 = vld [vmem:[#allocation8 + $0x28] sm:$0xf]
        %v687 = vld [vmem:[#allocation8 + $0x2c] sm:$0xf]
        %v688 = vld [vmem:[#allocation8 + $0x30] sm:$0xf]
        %v689 = vld [vmem:[#allocation8 + $0x34] sm:$0xf]
        %v690 = vld [vmem:[#allocation8 + $0x38] sm:$0xf]
        %v691 = vld [vmem:[#allocation8 + $0x3c] sm:$0xf]
        %v708 = vunpack.c.l.b16 %v676
        %v709 = vunpack.c.l.b16 %v677
        %v710 = vunpack.c.l.b16 %v678
        %v711 = vunpack.c.l.b16 %v679
        %v712 = vunpack.c.l.b16 %v680
        %v713 = vunpack.c.l.b16 %v681
        %v714 = vunpack.c.l.b16 %v682
        %v715 = vunpack.c.l.b16 %v683
        %v716 = vunpack.c.l.b16 %v684
        %v717 = vunpack.c.l.b16 %v685
        %v718 = vunpack.c.l.b16 %v686
        %v719 = vunpack.c.l.b16 %v687
        %v720 = vunpack.c.l.b16 %v688
        %v721 = vunpack.c.l.b16 %v689
        %v722 = vunpack.c.l.b16 %v690
        %v723 = vunpack.c.l.b16 %v691
        %v724 = vpack.c.b16 %v709, %v708
        %v725 = vpack.c.b16 %v711, %v710
        %v726 = vpack.c.b16 %v713, %v712
        %v727 = vpack.c.b16 %v715, %v714
        %v728 = vpack.c.b16 %v717, %v716
        %v729 = vpack.c.b16 %v719, %v718
        %v730 = vpack.c.b16 %v721, %v720
        %v731 = vpack.c.b16 %v723, %v722
        %740 = vmatpush.bf16.msra.mxu0 %v731
        %741 = vmatpush.bf16.msra.mxu0 %v730
        %742 = vmatpush.bf16.msra.mxu0 %v729
        %743 = vmatpush.bf16.msra.mxu0 %v728
        %744 = vmatpush.bf16.msra.mxu0 %v727
        %745 = vmatpush.bf16.msra.mxu0 %v726
        %746 = vmatpush.bf16.msra.mxu0 %v725
        %747 = vmatpush.bf16.msra.mxu0 %v724
        %748 = vmatmul.bf16.gmra.mxu0 %v675
        %v749 = vpop.f32.mrf.mxu0
        %v750 = vadd.f32 0.0, %v749
        %v751 = vpop.f32.mrf.mxu0
        %v752 = vadd.f32 0.0, %v751
        %753 = vdwg.mxu0
        %v754 = vpack.c.bf16 %v750, %v750
        %v755 = vpack.c.bf16 %v752, %v752
        %v756 = vld [vmem:[%s6] sm:$0x1]
        %v758 = vpack.i.b16 %v756, %v756
        %v760 = vperm.slane %v758, 0
        %v761 = vunpack.c.l.bf16 %v754
        %v762 = vunpack.c.l.bf16 %v755
        %v763 = vunpack.c.l.bf16 %v760
        %v764 = vadd.f32 %v761, %v763
        %v765 = vadd.f32 %v762, %v763
        %v766 = vpack.c.bf16 %v764, %v764
        %v767 = vpack.c.bf16 %v765, %v765
        %768 = vst [vmem:[%s380] sm:$0xf] %v571
        %769 = vst [vmem:[%s380 + $0x4] sm:$0xf] %v572
        %770 = vst [vmem:[%s387] sm:$0xf] %v766
        %771 = vst [vmem:[%s387 + $0x4] sm:$0xf] %v767
        %s772 = sand.u32 %s191, 1
        %s773 = scalar_lea.sflag [#allocation4], %s772
        %s774 = sand.u32 %s191, 1
        %s775 = smul.addr %s774, 8
        %s776 = scalar_lea.vmem [#allocation10], %s775
        %s777 = sand.u32 %s217, 1
        %s778 = scalar_lea.sflag [#allocation12], %s777
        %s779 = sand.u32 %s217, 1
        %s780 = smul.addr %s779, 8
        %s781 = scalar_lea.vmem [#allocation11], %s780
        // Predicated region
        $region65: #{tpu_custom_call.1} parent=47 // pred_check
          %p782 = pneg %p201
        $region66: #{tpu_custom_call.1} parent=47 // pred_check_branch
          %784 = sbr.rel (%p782) target = $region68
        $region67: #{tpu_custom_call.1} parent=47 // pred_region
          %s785 = smul.u32 2, %s31
          %787 = vsyncadd %s773, 0
          %s788 = smul.addr %s785, 4
          %s789 = scalar_lea.hbm %s7, %s788
          %s790 = sshll.u32 %s776, 4
          %s791 = int_to_ptr.vmem [resolvable:$true] %s790
          %s792 = sshll.u32 %s789, 4
          %s793 = int_to_ptr.hbm [resolvable:$true] %s792
          %798 = dma.vmem_to_hbm [thread:$0]  %s791, 128, %s793, %s773, 64, 64, 4
        $region68: #{tpu_custom_call.1} parent=47 // pred_fallthru
          _
        // Predicated region
        $region69: #{tpu_custom_call.1} parent=47 // pred_check
          %p799 = pneg %p227
        $region70: #{tpu_custom_call.1} parent=47 // pred_check_branch
          %801 = sbr.rel (%p799) target = $region72
        $region71: #{tpu_custom_call.1} parent=47 // pred_region
          %s802 = smul.u32 2, %s31
          %804 = vsyncadd %s778, 0
          %s805 = smul.addr %s802, 4
          %s806 = scalar_lea.hbm %s8, %s805
          %s807 = sshll.u32 %s781, 4
          %s808 = int_to_ptr.vmem [resolvable:$true] %s807
          %s809 = sshll.u32 %s806, 4
          %s810 = int_to_ptr.hbm [resolvable:$true] %s809
          %815 = dma.vmem_to_hbm [thread:$0]  %s808, 128, %s810, %s778, 64, 64, 4
        $region72: #{tpu_custom_call.1} parent=47 // pred_fallthru
          _
      $region48: #{tpu_custom_call.1} parent=5 // pred_fallthru
        _
      %p816 = scmp.le.s32.totalorder 2, %s26
      // Predicated region
      $region73: #{tpu_custom_call.1} parent=5 // pred_check
        %p817 = pneg %p816
      $region74: #{tpu_custom_call.1} parent=5 // pred_check_branch
        %819 = sbr.rel (%p817) target = $region76
      $region75: #{tpu_custom_call.1} parent=5 // pred_region
        %s820 = ssub.s32 %s26, 2
        // Predicated region
        $region77: #{tpu_custom_call.1} parent=75 // pred_check
          %p821 = pneg %p207
        $region78: #{tpu_custom_call.1} parent=75 // pred_check_branch
          %823 = sbr.rel (%p821) target = $region80
        $region79: #{tpu_custom_call.1} parent=75 // pred_region
          %s824 = sand.u32 %s192, 1
          %s825 = scalar_lea.sflag [#allocation4], %s824
          %s826 = sand.u32 %s192, 1
          %s827 = smul.addr %s826, 8
          %s828 = scalar_lea.vmem [#allocation10], %s827
          %830 = dma.done %s825, 128
        $region80: #{tpu_custom_call.1} parent=75 // pred_fallthru
          _
        // Predicated region
        $region81: #{tpu_custom_call.1} parent=75 // pred_check
          %p831 = pneg %p233
        $region82: #{tpu_custom_call.1} parent=75 // pred_check_branch
          %833 = sbr.rel (%p831) target = $region84
        $region83: #{tpu_custom_call.1} parent=75 // pred_region
          %s834 = sand.u32 %s218, 1
          %s835 = scalar_lea.sflag [#allocation12], %s834
          %s836 = sand.u32 %s218, 1
          %s837 = smul.addr %s836, 8
          %s838 = scalar_lea.vmem [#allocation11], %s837
          %840 = dma.done %s835, 128
        $region84: #{tpu_custom_call.1} parent=75 // pred_fallthru
          _
      $region76: #{tpu_custom_call.1} parent=5 // pred_fallthru
        _
    $region6: #{tpu_custom_call.1} parent=1 // loop_footer
      %s30 = sadd.s32 1, %s26
    $region7: #{tpu_custom_call.1} parent=1 // loop_footer_branch
      %25 = sbr.rel target = $region3
    $region8: #{tpu_custom_call.1} parent=1 // loop_exit
      _
    %841 = vsyncpa [#allocation3], 1
    %s842 = scalar_lea.sflag [#allocation3], 1
    %843 = vsyncpa %s842, 1
    %844 = vsyncpa [#allocation6], 1
    %845 = vsyncpa [#allocation9], 1
    %846 = vsyncpa [#allocation4], 1
    %s847 = scalar_lea.sflag [#allocation4], 1
    %848 = vsyncpa %s847, 1
    %849 = vsyncpa [#allocation12], 1
    %s850 = scalar_lea.sflag [#allocation12], 1
    %851 = vsyncpa %s850, 1

// kernel: tpu_custom_call.1
$region0: #{tpu_custom_call.1}
  #allocation0 [shape = 'u32[]', space=smem, size = 0x4, offset = 0x4, fixed_abs, tag = 'smem constant byte address 0x4 - core index']
  #allocation1 [shape = 'u32[72,128]{1,0:T(1,128)}', space=vmem, size = 0x9000, scoped, tag = 'internal scratch']
  %s0 = inlined_call_operand.hbm [shape: bf16[32,256], index: 0, kind: input, shape index: {}]
  %s1 = inlined_call_operand.hbm [shape: bf16[256,128], index: 1, kind: input, shape index: {}]
  %s2 = inlined_call_operand.vmem [shape: bf16[1,128], index: 2, kind: input, shape index: {}]
  %s3 = inlined_call_operand.hbm [shape: bf16[128,128], index: 3, kind: input, shape index: {}]
  %s4 = inlined_call_operand.vmem [shape: bf16[1,128], index: 4, kind: input, shape index: {}]
  %s5 = inlined_call_operand.hbm [shape: bf16[128,128], index: 5, kind: input, shape index: {}]
  %s6 = inlined_call_operand.vmem [shape: bf16[1,128], index: 6, kind: input, shape index: {}]
  %s7 = inlined_call_operand.hbm [shape: bf16[32,128], index: 7, kind: output, shape index: {0}]
  %s8 = inlined_call_operand.hbm [shape: bf16[32,128], index: 8, kind: output, shape index: {1}]
  %9 = xla_tuple %s7, %s8
  %s10 = sld [smem:[#allocation0]]
  $region85: #{tpu_custom_call.1} parent=0
    _
  %s12 = ssub.s32 1, %s10
  %s13 = scalar_select 0, %s12, %s10
  $region1: #{tpu_custom_call.1} parent=0
    #allocation2 [shape = 'u8[16384]{0}', space=vmem, size = 0x4000, scoped, tag = 'input window, operand 0']
    #allocation3 [shape = 's32[2]{0}', space=sflag, size = 0x8, scoped, tag = 'scoped memory for tpu_custom_call.1']
    #allocation4 [shape = 's32[2]{0}', space=sflag, size = 0x8, scoped, tag = 'scoped memory for tpu_custom_call.1']
    #allocation5 [shape = 'u8[65536]{0}', space=vmem, size = 0x10000, scoped, tag = 'input window, operand 1, single buffered']
    #allocation6 [shape = 's32[1]{0}', space=sflag, size = 0x4, scoped, tag = 'scoped memory for tpu_custom_call.1']
    #allocation7 [shape = 'u8[32768]{0}', space=vmem, size = 0x8000, scoped, tag = 'input window, operand 3, single buffered']
    #allocation8 [shape = 'u8[32768]{0}', space=vmem, size = 0x8000, scoped, tag = 'input window, operand 5, single buffered']
    #allocation9 [shape = 's32[1]{0}', space=sflag, size = 0x4, scoped, tag = 'scoped memory for tpu_custom_call.1']
    #allocation10 [shape = 'u8[8192]{0}', space=vmem, size = 0x2000, scoped, tag = 'output window, operand 0']
    #allocation11 [shape = 'u8[8192]{0}', space=vmem, size = 0x2000, scoped, tag = 'output window, operand 1']
    #allocation12 [shape = 's32[2]{0}', space=sflag, size = 0x8, scoped, tag = 'scoped memory for tpu_custom_call.1']
    %14 = vsyncpa [#allocation3], 0
    %s15 = scalar_lea.sflag [#allocation3], 1
    %16 = vsyncpa %s15, 0
    %17 = vsyncpa [#allocation6], 0
    %18 = vsyncpa [#allocation9], 0
    %19 = vsyncpa [#allocation4], 0
    %s20 = scalar_lea.sflag [#allocation4], 1
    %21 = vsyncpa %s20, 0
    %22 = vsyncpa [#allocation12], 0
    %s23 = scalar_lea.sflag [#allocation12], 1
    %24 = vsyncpa %s23, 0
    loop: start=0, step=1, limit=4
    $region2: #{tpu_custom_call.1} parent=1 // loop_pre_header
      _
    $region3: #{tpu_custom_call.1} parent=1 // loop_header
      %s26 = sphi 0, %s30
      %p27 = scmp.ge.s32.totalorder %s26, 4
      %s36 = sphi 0, %s38
      %s39 = sphi 0, %s36
      %s40 = sphi 0, %s39
      %s56 = sphi 0, %s40
      %s60 = sphi 0, %s60
      %s62 = sphi 0, %s60
      %s63 = sphi 0, %s62
      %s77 = sphi 0, %s63
      %s81 = sphi 0, %s81
      %s83 = sphi 0, %s81
      %s84 = sphi 0, %s83
      %s98 = sphi 0, %s84
      %s102 = sphi 0, %s102
      %s104 = sphi 0, %s102
      %s105 = sphi 0, %s104
      %s119 = sphi 0, %s105
      %s123 = sphi 0, %s123
      %s125 = sphi 0, %s123
      %s126 = sphi 0, %s125
      %s140 = sphi 0, %s126
      %s144 = sphi 0, %s144
      %s146 = sphi 0, %s144
      %s147 = sphi 0, %s146
      %s161 = sphi 0, %s147
      %s165 = sphi 0, %s165
      %s167 = sphi 0, %s165
      %s168 = sphi 0, %s167
      %s182 = sphi 0, %s168
      %s188 = sphi 0, %s190
      %s191 = sphi 0, %s188
      %s192 = sphi 0, %s191
      %s208 = sphi 0, %s192
      %s214 = sphi 0, %s216
      %s217 = sphi 0, %s214
      %s218 = sphi 0, %s217
      %s234 = sphi 0, %s218
    $region4: #{tpu_custom_call.1} parent=1 // loop_header_branch
      %29 = sbr.rel (%p27) target = $region8
    $region5: #{tpu_custom_call.1} parent=1 // loop_body
      %s31 = ssub.s32 %s26, 1
      %s32 = ssub.s32 %s26, 2
      %s33 = sadd.s32 %s26, 1
      %s34 = ssub.s32 %s26, %s33
      %p35 = scmp.eq.s32.totalorder %s34, 0
      %s37 = sadd.s32 %s36, 1
      %s38 = scalar_select %p35, %s36, %s37
      %p41 = pneg %p35
      %p42 = scmp.eq.s32.totalorder %s26, 1
      %p43 = por %p41, %p42
      %p44 = scmp.ne.s32.totalorder %s36, %s39
      %p45 = scmp.eq.s32.totalorder %s26, 0
      %p46 = por %p44, %p45
      %p47 = scmp.ne.s32.totalorder %s36, %s39
      %p48 = scmp.eq.s32.totalorder %s31, 1
      %p49 = por %p47, %p48
      %p50 = scmp.ne.s32.totalorder %s39, %s40
      %p51 = scmp.eq.s32.totalorder %s31, 0
      %p52 = por %p50, %p51
      %p53 = scmp.ne.s32.totalorder %s39, %s40
      %p54 = scmp.eq.s32.totalorder %s32, 1
      %p55 = por %p53, %p54
      %p57 = scmp.ne.s32.totalorder %s40, %s56
      %p58 = scmp.eq.s32.totalorder %s32, 0
      %p59 = por %p57, %p58
      %s61 = sadd.s32 %s60, 1
      %p64 = scmp.eq.s32.totalorder %s26, 1
      %p65 = scmp.ne.s32.totalorder %s60, %s62
      %p66 = scmp.eq.s32.totalorder %s26, 0
      %p67 = por %p65, %p66
      %p68 = scmp.ne.s32.totalorder %s60, %s62
      %p69 = scmp.eq.s32.totalorder %s31, 1
      %p70 = por %p68, %p69
      %p71 = scmp.ne.s32.totalorder %s62, %s63
      %p72 = scmp.eq.s32.totalorder %s31, 0
      %p73 = por %p71, %p72
      %p74 = scmp.ne.s32.totalorder %s62, %s63
      %p75 = scmp.eq.s32.totalorder %s32, 1
      %p76 = por %p74, %p75
      %p78 = scmp.ne.s32.totalorder %s63, %s77
      %p79 = scmp.eq.s32.totalorder %s32, 0
      %p80 = por %p78, %p79
      %s82 = sadd.s32 %s81, 1
      %p85 = scmp.eq.s32.totalorder %s26, 1
      %p86 = scmp.ne.s32.totalorder %s81, %s83
      %p87 = scmp.eq.s32.totalorder %s26, 0
      %p88 = por %p86, %p87
      %p89 = scmp.ne.s32.totalorder %s81, %s83
      %p90 = scmp.eq.s32.totalorder %s31, 1
      %p91 = por %p89, %p90
      %p92 = scmp.ne.s32.totalorder %s83, %s84
      %p93 = scmp.eq.s32.totalorder %s31, 0
      %p94 = por %p92, %p93
      %p95 = scmp.ne.s32.totalorder %s83, %s84
      %p96 = scmp.eq.s32.totalorder %s32, 1
      %p97 = por %p95, %p96
      %p99 = scmp.ne.s32.totalorder %s84, %s98
      %p100 = scmp.eq.s32.totalorder %s32, 0
      %p101 = por %p99, %p100
      %s103 = sadd.s32 %s102, 1
      %p106 = scmp.eq.s32.totalorder %s26, 1
      %p107 = scmp.ne.s32.totalorder %s102, %s104
      %p108 = scmp.eq.s32.totalorder %s26, 0
      %p109 = por %p107, %p108
      %p110 = scmp.ne.s32.totalorder %s102, %s104
      %p111 = scmp.eq.s32.totalorder %s31, 1
      %p112 = por %p110, %p111
      %p113 = scmp.ne.s32.totalorder %s104, %s105
      %p114 = scmp.eq.s32.totalorder %s31, 0
      %p115 = por %p113, %p114
      %p116 = scmp.ne.s32.totalorder %s104, %s105
      %p117 = scmp.eq.s32.totalorder %s32, 1
      %p118 = por %p116, %p117
      %p120 = scmp.ne.s32.totalorder %s105, %s119
      %p121 = scmp.eq.s32.totalorder %s32, 0
      %p122 = por %p120, %p121
      %s124 = sadd.s32 %s123, 1
      %p127 = scmp.eq.s32.totalorder %s26, 1
      %p128 = scmp.ne.s32.totalorder %s123, %s125
      %p129 = scmp.eq.s32.totalorder %s26, 0
      %p130 = por %p128, %p129
      %p131 = scmp.ne.s32.totalorder %s123, %s125
      %p132 = scmp.eq.s32.totalorder %s31, 1
      %p133 = por %p131, %p132
      %p134 = scmp.ne.s32.totalorder %s125, %s126
      %p135 = scmp.eq.s32.totalorder %s31, 0
      %p136 = por %p134, %p135
      %p137 = scmp.ne.s32.totalorder %s125, %s126
      %p138 = scmp.eq.s32.totalorder %s32, 1
      %p139 = por %p137, %p138
      %p141 = scmp.ne.s32.totalorder %s126, %s140
      %p142 = scmp.eq.s32.totalorder %s32, 0
      %p143 = por %p141, %p142
      %s145 = sadd.s32 %s144, 1
      %p148 = scmp.eq.s32.totalorder %s26, 1
      %p149 = scmp.ne.s32.totalorder %s144, %s146
      %p150 = scmp.eq.s32.totalorder %s26, 0
      %p151 = por %p149, %p150
      %p152 = scmp.ne.s32.totalorder %s144, %s146
      %p153 = scmp.eq.s32.totalorder %s31, 1
      %p154 = por %p152, %p153
      %p155 = scmp.ne.s32.totalorder %s146, %s147
      %p156 = scmp.eq.s32.totalorder %s31, 0
      %p157 = por %p155, %p156
      %p158 = scmp.ne.s32.totalorder %s146, %s147
      %p159 = scmp.eq.s32.totalorder %s32, 1
      %p160 = por %p158, %p159
      %p162 = scmp.ne.s32.totalorder %s147, %s161
      %p163 = scmp.eq.s32.totalorder %s32, 0
      %p164 = por %p162, %p163
      %s166 = sadd.s32 %s165, 1
      %p169 = scmp.eq.s32.totalorder %s26, 1
      %p170 = scmp.ne.s32.totalorder %s165, %s167
      %p171 = scmp.eq.s32.totalorder %s26, 0
      %p172 = por %p170, %p171
      %p173 = scmp.ne.s32.totalorder %s165, %s167
      %p174 = scmp.eq.s32.totalorder %s31, 1
      %p175 = por %p173, %p174
      %p176 = scmp.ne.s32.totalorder %s167, %s168
      %p177 = scmp.eq.s32.totalorder %s31, 0
      %p178 = por %p176, %p177
      %p179 = scmp.ne.s32.totalorder %s167, %s168
      %p180 = scmp.eq.s32.totalorder %s32, 1
      %p181 = por %p179, %p180
      %p183 = scmp.ne.s32.totalorder %s168, %s182
      %p184 = scmp.eq.s32.totalorder %s32, 0
      %p185 = por %p183, %p184
      %s186 = ssub.s32 %s26, %s33
      %p187 = scmp.eq.s32.totalorder %s186, 0
      %s189 = sadd.s32 %s188, 1
      %s190 = scalar_select %p187, %s188, %s189
      %p193 = pneg %p187
      %p194 = scmp.eq.s32.totalorder %s26, 1
      %p195 = por %p193, %p194
      %p196 = scmp.ne.s32.totalorder %s188, %s191
      %p197 = scmp.eq.s32.totalorder %s26, 0
      %p198 = por %p196, %p197
      %p199 = scmp.ne.s32.totalorder %s188, %s191
      %p200 = scmp.eq.s32.totalorder %s31, 1
      %p201 = por %p199, %p200
      %p202 = scmp.ne.s32.totalorder %s191, %s192
      %p203 = scmp.eq.s32.totalorder %s31, 0
      %p204 = por %p202, %p203
      %p205 = scmp.ne.s32.totalorder %s191, %s192
      %p206 = scmp.eq.s32.totalorder %s32, 1
      %p207 = por %p205, %p206
      %p209 = scmp.ne.s32.totalorder %s192, %s208
      %p210 = scmp.eq.s32.totalorder %s32, 0
      %p211 = por %p209, %p210
      %s212 = ssub.s32 %s26, %s33
      %p213 = scmp.eq.s32.totalorder %s212, 0
      %s215 = sadd.s32 %s214, 1
      %s216 = scalar_select %p213, %s214, %s215
      %p219 = pneg %p213
      %p220 = scmp.eq.s32.totalorder %s26, 1
      %p221 = por %p219, %p220
      %p222 = scmp.ne.s32.totalorder %s214, %s217
      %p223 = scmp.eq.s32.totalorder %s26, 0
      %p224 = por %p222, %p223
      %p225 = scmp.ne.s32.totalorder %s214, %s217
      %p226 = scmp.eq.s32.totalorder %s31, 1
      %p227 = por %p225, %p226
      %p228 = scmp.ne.s32.totalorder %s217, %s218
      %p229 = scmp.eq.s32.totalorder %s31, 0
      %p230 = por %p228, %p229
      %p231 = scmp.ne.s32.totalorder %s217, %s218
      %p232 = scmp.eq.s32.totalorder %s32, 1
      %p233 = por %p231, %p232
      %p235 = scmp.ne.s32.totalorder %s218, %s234
      %p236 = scmp.eq.s32.totalorder %s32, 0
      %p237 = por %p235, %p236
      %p238 = scmp.le.s32.totalorder 1, %s26
      %p239 = scmp.lt.s32.totalorder %s26, 3
      %p240 = pnand %p238, %p239
      %p241 = pneg %p240
      // Predicated region
      $region9: #{tpu_custom_call.1} parent=5 // pred_check
        _
      $region10: #{tpu_custom_call.1} parent=5 // pred_check_branch
        %243 = sbr.rel (%p240) target = $region12
      $region11: #{tpu_custom_call.1} parent=5 // pred_region
        %s244 = ssub.s32 %s26, 1
        // Predicated region
        $region13: #{tpu_custom_call.1} parent=11 // pred_check
          %p245 = pneg %p73
        $region14: #{tpu_custom_call.1} parent=11 // pred_check_branch
          %247 = sbr.rel (%p245) target = $region16
        $region15: #{tpu_custom_call.1} parent=11 // pred_region
          %249 = vsyncadd [#allocation6], 0
          %s250 = sshll.u32 %s1, 4
          %s251 = int_to_ptr.hbm [resolvable:$true] %s250
          %s252 = sshll.u32 [#allocation5], 4
          %s253 = int_to_ptr.vmem [resolvable:$true] %s252
          %258 = dma.hbm_to_vmem [thread:$0]  %s251, 2048, %s253, [#allocation6], 64, 64, 4
        $region16: #{tpu_custom_call.1} parent=11 // pred_fallthru
          _
        // Predicated region
        $region17: #{tpu_custom_call.1} parent=11 // pred_check
          %p259 = pneg %p94
        $region18: #{tpu_custom_call.1} parent=11 // pred_check_branch
          %261 = sbr.rel (%p259) target = $region20
        $region19: #{tpu_custom_call.1} parent=11 // pred_region
          _
        $region20: #{tpu_custom_call.1} parent=11 // pred_fallthru
          _
        // Predicated region
        $region21: #{tpu_custom_call.1} parent=11 // pred_check
          %p262 = pneg %p115
        $region22: #{tpu_custom_call.1} parent=11 // pred_check_branch
          %264 = sbr.rel (%p262) target = $region24
        $region23: #{tpu_custom_call.1} parent=11 // pred_region
          %266 = vsyncadd [#allocation6], 0
          %s267 = sshll.u32 %s3, 4
          %s268 = int_to_ptr.hbm [resolvable:$true] %s267
          %s269 = sshll.u32 [#allocation7], 4
          %s270 = int_to_ptr.vmem [resolvable:$true] %s269
          %275 = dma.hbm_to_vmem [thread:$0]  %s268, 1024, %s270, [#allocation6], 64, 64, 4
        $region24: #{tpu_custom_call.1} parent=11 // pred_fallthru
          _
        // Predicated region
        $region25: #{tpu_custom_call.1} parent=11 // pred_check
          %p276 = pneg %p136
        $region26: #{tpu_custom_call.1} parent=11 // pred_check_branch
          %278 = sbr.rel (%p276) target = $region28
        $region27: #{tpu_custom_call.1} parent=11 // pred_region
          _
        $region28: #{tpu_custom_call.1} parent=11 // pred_fallthru
          _
        // Predicated region
        $region29: #{tpu_custom_call.1} parent=11 // pred_check
          %p279 = pneg %p157
        $region30: #{tpu_custom_call.1} parent=11 // pred_check_branch
          %281 = sbr.rel (%p279) target = $region32
        $region31: #{tpu_custom_call.1} parent=11 // pred_region
          %283 = vsyncadd [#allocation9], 0
          %s284 = sshll.u32 %s5, 4
          %s285 = int_to_ptr.hbm [resolvable:$true] %s284
          %s286 = sshll.u32 [#allocation8], 4
          %s287 = int_to_ptr.vmem [resolvable:$true] %s286
          %292 = dma.hbm_to_vmem [thread:$0]  %s285, 1024, %s287, [#allocation9], 64, 64, 4
        $region32: #{tpu_custom_call.1} parent=11 // pred_fallthru
          _
        // Predicated region
        $region33: #{tpu_custom_call.1} parent=11 // pred_check
          %p293 = pneg %p178
        $region34: #{tpu_custom_call.1} parent=11 // pred_check_branch
          %295 = sbr.rel (%p293) target = $region36
        $region35: #{tpu_custom_call.1} parent=11 // pred_region
          _
        $region36: #{tpu_custom_call.1} parent=11 // pred_fallthru
          _
      $region12: #{tpu_custom_call.1} parent=5 // pred_fallthru
        _
      %p296 = scmp.lt.s32.totalorder %s26, 2
      // Predicated region
      $region37: #{tpu_custom_call.1} parent=5 // pred_check
        %p297 = pneg %p296
      $region38: #{tpu_custom_call.1} parent=5 // pred_check_branch
        %299 = sbr.rel (%p297) target = $region40
      $region39: #{tpu_custom_call.1} parent=5 // pred_region
        // Predicated region
        $region41: #{tpu_custom_call.1} parent=39 // pred_check
          %p300 = pneg %p46
        $region42: #{tpu_custom_call.1} parent=39 // pred_check_branch
          %302 = sbr.rel (%p300) target = $region44
        $region43: #{tpu_custom_call.1} parent=39 // pred_region
          %s303 = sand.u32 %s36, 1
          %s304 = scalar_lea.sflag [#allocation3], %s303
          %s305 = sand.u32 %s36, 1
          %s306 = smul.addr %s305, 16
          %s307 = scalar_lea.vmem [#allocation2], %s306
          %s308 = smul.u32 2, %s26
          %310 = vsyncadd %s304, 0
          %s311 = smul.addr %s308, 2
          %s312 = smul.addr %s311, 4
          %s313 = scalar_lea.hbm %s0, %s312
          %s314 = sshll.u32 %s313, 4
          %s315 = int_to_ptr.hbm [resolvable:$true] %s314
          %s316 = sshll.u32 %s307, 4
          %s317 = int_to_ptr.vmem [resolvable:$true] %s316
          %322 = dma.hbm_to_vmem [thread:$0]  %s315, 256, %s317, %s304, 128, 128, 8
        $region44: #{tpu_custom_call.1} parent=39 // pred_fallthru
          _
      $region40: #{tpu_custom_call.1} parent=5 // pred_fallthru
        _
      %p323 = scmp.le.s32.totalorder 1, %s26
      %p324 = scmp.lt.s32.totalorder %s26, 3
      %p325 = pnand %p323, %p324
      %p326 = pneg %p325
      // Predicated region
      $region45: #{tpu_custom_call.1} parent=5 // pred_check
        _
      $region46: #{tpu_custom_call.1} parent=5 // pred_check_branch
        %328 = sbr.rel (%p325) target = $region48
      $region47: #{tpu_custom_call.1} parent=5 // pred_region
        %s329 = ssub.s32 %s26, 1
        %s330 = sand.u32 %s39, 1
        %s331 = scalar_lea.sflag [#allocation3], %s330
        %s332 = sand.u32 %s39, 1
        %s333 = smul.addr %s332, 16
        %s334 = scalar_lea.vmem [#allocation2], %s333
        // Predicated region
        $region49: #{tpu_custom_call.1} parent=47 // pred_check
          %p335 = pneg %p52
        $region50: #{tpu_custom_call.1} parent=47 // pred_check_branch
          %337 = sbr.rel (%p335) target = $region52
        $region51: #{tpu_custom_call.1} parent=47 // pred_region
          %339 = dma.done %s331, 256
        $region52: #{tpu_custom_call.1} parent=47 // pred_fallthru
          _
        // Predicated region
        $region53: #{tpu_custom_call.1} parent=47 // pred_check
          %p340 = pneg %p73
        $region54: #{tpu_custom_call.1} parent=47 // pred_check_branch
          %342 = sbr.rel (%p340) target = $region56
        $region55: #{tpu_custom_call.1} parent=47 // pred_region
          %344 = dma.done [#allocation6], 2048
        $region56: #{tpu_custom_call.1} parent=47 // pred_fallthru
          _
        // Predicated region
        $region57: #{tpu_custom_call.1} parent=47 // pred_check
          %p345 = pneg %p115
        $region58: #{tpu_custom_call.1} parent=47 // pred_check_branch
          %347 = sbr.rel (%p345) target = $region60
        $region59: #{tpu_custom_call.1} parent=47 // pred_region
          %349 = dma.done [#allocation6], 1024
        $region60: #{tpu_custom_call.1} parent=47 // pred_fallthru
          _
        // Predicated region
        $region61: #{tpu_custom_call.1} parent=47 // pred_check
          %p350 = pneg %p157
        $region62: #{tpu_custom_call.1} parent=47 // pred_check_branch
          %352 = sbr.rel (%p350) target = $region64
        $region63: #{tpu_custom_call.1} parent=47 // pred_region
          %354 = dma.done [#allocation9], 1024
        $region64: #{tpu_custom_call.1} parent=47 // pred_fallthru
          _
        %s355 = sand.u32 %s39, 1
        %s356 = scalar_lea.sflag [#allocation3], %s355
        %s357 = sand.u32 %s39, 1
        %s358 = smul.addr %s357, 16
        %s359 = scalar_lea.vmem [#allocation2], %s358
        %p360 = pneg %p52
        %p361 = pneg %p49
        %p362 = pneg %p73
        %p363 = pneg %p70
        %p364 = pneg %p94
        %p365 = pneg %p91
        %p366 = pneg %p115
        %p367 = pneg %p112
        %p368 = pneg %p136
        %p369 = pneg %p133
        %p370 = pneg %p157
        %p371 = pneg %p154
        %p372 = pneg %p178
        %p373 = pneg %p175
        %p374 = pneg %p204
        %p375 = pneg %p201
        %s376 = sand.u32 %s191, 1
        %s377 = scalar_lea.sflag [#allocation4], %s376
        %s378 = sand.u32 %s191, 1
        %s379 = smul.addr %s378, 8
        %s380 = scalar_lea.vmem [#allocation10], %s379
        %p381 = pneg %p230
        %p382 = pneg %p227
        %s383 = sand.u32 %s217, 1
        %s384 = scalar_lea.sflag [#allocation12], %s383
        %s385 = sand.u32 %s217, 1
        %s386 = smul.addr %s385, 8
        %s387 = scalar_lea.vmem [#allocation11], %s386
        %s388 = smul.u32 2, %s31
        %s389 = smul.u32 2, %s31
        %s390 = smul.u32 2, %s31
        %v391 = vld [vmem:[%s334] sm:$0xff]
        %v392 = vld [vmem:[%s334 + $0x8] sm:$0xff]
        %v393 = vld [vmem:[#allocation5] sm:$0xf]
        %v394 = vld [vmem:[#allocation5 + $0x4] sm:$0xf]
        %v395 = vld [vmem:[#allocation5 + $0x8] sm:$0xf]
        %v396 = vld [vmem:[#allocation5 + $0xc] sm:$0xf]
        %v397 = vld [vmem:[#allocation5 + $0x10] sm:$0xf]
        %v398 = vld [vmem:[#allocation5 + $0x14] sm:$0xf]
        %v399 = vld [vmem:[#allocation5 + $0x18] sm:$0xf]
        %v400 = vld [vmem:[#allocation5 + $0x1c] sm:$0xf]
        %v401 = vld [vmem:[#allocation5 + $0x20] sm:$0xf]
        %v402 = vld [vmem:[#allocation5 + $0x24] sm:$0xf]
        %v403 = vld [vmem:[#allocation5 + $0x28] sm:$0xf]
        %v404 = vld [vmem:[#allocation5 + $0x2c] sm:$0xf]
        %v405 = vld [vmem:[#allocation5 + $0x30] sm:$0xf]
        %v406 = vld [vmem:[#allocation5 + $0x34] sm:$0xf]
        %v407 = vld [vmem:[#allocation5 + $0x38] sm:$0xf]
        %v408 = vld [vmem:[#allocation5 + $0x3c] sm:$0xf]
        %v409 = vld [vmem:[#allocation5 + $0x40] sm:$0xf]
        %v410 = vld [vmem:[#allocation5 + $0x44] sm:$0xf]
        %v411 = vld [vmem:[#allocation5 + $0x48] sm:$0xf]
        %v412 = vld [vmem:[#allocation5 + $0x4c] sm:$0xf]
        %v413 = vld [vmem:[#allocation5 + $0x50] sm:$0xf]
        %v414 = vld [vmem:[#allocation5 + $0x54] sm:$0xf]
        %v415 = vld [vmem:[#allocation5 + $0x58] sm:$0xf]
        %v416 = vld [vmem:[#allocation5 + $0x5c] sm:$0xf]
        %v417 = vld [vmem:[#allocation5 + $0x60] sm:$0xf]
        %v418 = vld [vmem:[#allocation5 + $0x64] sm:$0xf]
        %v419 = vld [vmem:[#allocation5 + $0x68] sm:$0xf]
        %v420 = vld [vmem:[#allocation5 + $0x6c] sm:$0xf]
        %v421 = vld [vmem:[#allocation5 + $0x70] sm:$0xf]
        %v422 = vld [vmem:[#allocation5 + $0x74] sm:$0xf]
        %v423 = vld [vmem:[#allocation5 + $0x78] sm:$0xf]
        %v424 = vld [vmem:[#allocation5 + $0x7c] sm:$0xf]
        %v427 = vunpack.c.l.b16 %v391
        %v428 = vunpack.c.h.b16 %v391
        %v429 = vunpack.c.l.b16 %v392
        %v430 = vunpack.c.h.b16 %v392
        %v431 = vpack.c.b16 %v429, %v427
        %v432 = vpack.c.b16 %v430, %v428
        %v467 = vunpack.c.l.b16 %v393
        %v468 = vunpack.c.l.b16 %v394
        %v469 = vunpack.c.l.b16 %v395
        %v470 = vunpack.c.l.b16 %v396
        %v471 = vunpack.c.l.b16 %v397
        %v472 = vunpack.c.l.b16 %v398
        %v473 = vunpack.c.l.b16 %v399
        %v474 = vunpack.c.l.b16 %v400
        %v475 = vunpack.c.l.b16 %v401
        %v476 = vunpack.c.l.b16 %v402
        %v477 = vunpack.c.l.b16 %v403
        %v478 = vunpack.c.l.b16 %v404
        %v479 = vunpack.c.l.b16 %v405
        %v480 = vunpack.c.l.b16 %v406
        %v481 = vunpack.c.l.b16 %v407
        %v482 = vunpack.c.l.b16 %v408
        %v483 = vunpack.c.l.b16 %v409
        %v484 = vunpack.c.l.b16 %v410
        %v485 = vunpack.c.l.b16 %v411
        %v486 = vunpack.c.l.b16 %v412
        %v487 = vunpack.c.l.b16 %v413
        %v488 = vunpack.c.l.b16 %v414
        %v489 = vunpack.c.l.b16 %v415
        %v490 = vunpack.c.l.b16 %v416
        %v491 = vunpack.c.l.b16 %v417
        %v492 = vunpack.c.l.b16 %v418
        %v493 = vunpack.c.l.b16 %v419
        %v494 = vunpack.c.l.b16 %v420
        %v495 = vunpack.c.l.b16 %v421
        %v496 = vunpack.c.l.b16 %v422
        %v497 = vunpack.c.l.b16 %v423
        %v498 = vunpack.c.l.b16 %v424
        %v499 = vpack.c.b16 %v468, %v467
        %v500 = vpack.c.b16 %v470, %v469
        %v501 = vpack.c.b16 %v472, %v471
        %v502 = vpack.c.b16 %v474, %v473
        %v503 = vpack.c.b16 %v476, %v475
        %v504 = vpack.c.b16 %v478, %v477
        %v505 = vpack.c.b16 %v480, %v479
        %v506 = vpack.c.b16 %v482, %v481
        %v507 = vpack.c.b16 %v484, %v483
        %v508 = vpack.c.b16 %v486, %v485
        %v509 = vpack.c.b16 %v488, %v487
        %v510 = vpack.c.b16 %v490, %v489
        %v511 = vpack.c.b16 %v492, %v491
        %v512 = vpack.c.b16 %v494, %v493
        %v513 = vpack.c.b16 %v496, %v495
        %v514 = vpack.c.b16 %v498, %v497
        %531 = vmatpush.bf16.msra.mxu0 %v506
        %532 = vmatpush.bf16.msra.mxu0 %v505
        %533 = vmatpush.bf16.msra.mxu0 %v504
        %534 = vmatpush.bf16.msra.mxu0 %v503
        %535 = vmatpush.bf16.msra.mxu0 %v502
        %536 = vmatpush.bf16.msra.mxu0 %v501
        %537 = vmatpush.bf16.msra.mxu0 %v500
        %538 = vmatpush.bf16.msra.mxu0 %v499
        %539 = vmatmul.bf16.gmra.mxu0 %v431
        %v540 = vpop.f32.mrf.mxu0
        %v541 = vadd.f32 0.0, %v540
        %v542 = vpop.f32.mrf.mxu0
        %v543 = vadd.f32 0.0, %v542
        %544 = vdwg.mxu0
        %545 = vmatpush.bf16.msra.mxu0 %v514
        %546 = vmatpush.bf16.msra.mxu0 %v513
        %547 = vmatpush.bf16.msra.mxu0 %v512
        %548 = vmatpush.bf16.msra.mxu0 %v511
        %549 = vmatpush.bf16.msra.mxu0 %v510
        %550 = vmatpush.bf16.msra.mxu0 %v509
        %551 = vmatpush.bf16.msra.mxu0 %v508
        %552 = vmatpush.bf16.msra.mxu0 %v507
        %553 = vmatmul.bf16.gmra.mxu0 %v432
        %v554 = vpop.f32.mrf.mxu0
        %v555 = vadd.f32 %v541, %v554
        %v556 = vpop.f32.mrf.mxu0
        %v557 = vadd.f32 %v543, %v556
        %558 = vdwg.mxu0
        %v559 = vpack.c.bf16 %v555, %v555
        %v560 = vpack.c.bf16 %v557, %v557
        %v561 = vld [vmem:[%s2] sm:$0x1]
        %v563 = vpack.i.b16 %v561, %v561
        %v565 = vperm.slane %v563, 0
        %v566 = vunpack.c.l.bf16 %v559
        %v567 = vunpack.c.l.bf16 %v560
        %v568 = vunpack.c.l.bf16 %v565
        %v569 = vadd.f32 %v566, %v568
        %v570 = vadd.f32 %v567, %v568
        %v571 = vpack.c.bf16 %v569, %v569
        %v572 = vpack.c.bf16 %v570, %v570
        %v573 = vld [vmem:[#allocation7] sm:$0xf]
        %v574 = vld [vmem:[#allocation7 + $0x4] sm:$0xf]
        %v575 = vld [vmem:[#allocation7 + $0x8] sm:$0xf]
        %v576 = vld [vmem:[#allocation7 + $0xc] sm:$0xf]
        %v577 = vld [vmem:[#allocation7 + $0x10] sm:$0xf]
        %v578 = vld [vmem:[#allocation7 + $0x14] sm:$0xf]
        %v579 = vld [vmem:[#allocation7 + $0x18] sm:$0xf]
        %v580 = vld [vmem:[#allocation7 + $0x1c] sm:$0xf]
        %v581 = vld [vmem:[#allocation7 + $0x20] sm:$0xf]
        %v582 = vld [vmem:[#allocation7 + $0x24] sm:$0xf]
        %v583 = vld [vmem:[#allocation7 + $0x28] sm:$0xf]
        %v584 = vld [vmem:[#allocation7 + $0x2c] sm:$0xf]
        %v585 = vld [vmem:[#allocation7 + $0x30] sm:$0xf]
        %v586 = vld [vmem:[#allocation7 + $0x34] sm:$0xf]
        %v587 = vld [vmem:[#allocation7 + $0x38] sm:$0xf]
        %v588 = vld [vmem:[#allocation7 + $0x3c] sm:$0xf]
        %v591 = vunpack.c.l.b16 %v571
        %v592 = vunpack.c.l.b16 %v572
        %v593 = vpack.c.b16 %v592, %v591
        %v611 = vunpack.c.l.b16 %v573
        %v612 = vunpack.c.l.b16 %v574
        %v613 = vunpack.c.l.b16 %v575
        %v614 = vunpack.c.l.b16 %v576
        %v615 = vunpack.c.l.b16 %v577
        %v616 = vunpack.c.l.b16 %v578
        %v617 = vunpack.c.l.b16 %v579
        %v618 = vunpack.c.l.b16 %v580
        %v619 = vunpack.c.l.b16 %v581
        %v620 = vunpack.c.l.b16 %v582
        %v621 = vunpack.c.l.b16 %v583
        %v622 = vunpack.c.l.b16 %v584
        %v623 = vunpack.c.l.b16 %v585
        %v624 = vunpack.c.l.b16 %v586
        %v625 = vunpack.c.l.b16 %v587
        %v626 = vunpack.c.l.b16 %v588
        %v627 = vpack.c.b16 %v612, %v611
        %v628 = vpack.c.b16 %v614, %v613
        %v629 = vpack.c.b16 %v616, %v615
        %v630 = vpack.c.b16 %v618, %v617
        %v631 = vpack.c.b16 %v620, %v619
        %v632 = vpack.c.b16 %v622, %v621
        %v633 = vpack.c.b16 %v624, %v623
        %v634 = vpack.c.b16 %v626, %v625
        %643 = vmatpush.bf16.msra.mxu0 %v634
        %644 = vmatpush.bf16.msra.mxu0 %v633
        %645 = vmatpush.bf16.msra.mxu0 %v632
        %646 = vmatpush.bf16.msra.mxu0 %v631
        %647 = vmatpush.bf16.msra.mxu0 %v630
        %648 = vmatpush.bf16.msra.mxu0 %v629
        %649 = vmatpush.bf16.msra.mxu0 %v628
        %650 = vmatpush.bf16.msra.mxu0 %v627
        %651 = vmatmul.bf16.gmra.mxu0 %v593
        %v652 = vpop.f32.mrf.mxu0
        %v653 = vadd.f32 0.0, %v652
        %v654 = vpop.f32.mrf.mxu0
        %v655 = vadd.f32 0.0, %v654
        %656 = vdwg.mxu0
        %v657 = vpack.c.bf16 %v653, %v653
        %v658 = vpack.c.bf16 %v655, %v655
        %v659 = vld [vmem:[%s4] sm:$0x1]
        %v661 = vpack.i.b16 %v659, %v659
        %v663 = vperm.slane %v661, 0
        %v664 = vunpack.c.l.bf16 %v657
        %v665 = vunpack.c.l.bf16 %v658
        %v666 = vunpack.c.l.bf16 %v663
        %v667 = vadd.f32 %v664, %v666
        %v668 = vadd.f32 %v665, %v666
        %v669 = vpack.c.bf16 %v667, %v667
        %v670 = vpack.c.bf16 %v668, %v668
        %v671 = vunpack.c.l.bf16 %v669
        %v672 = vunpack.c.l.bf16 %v670
        %v673 = vmax.f32 %v671, 0.0
        %v674 = vmax.f32 %v672, 0.0
        %v675 = vpack.c.bf16 %v674, %v673
        %v676 = vld [vmem:[#allocation8] sm:$0xf]
        %v677 = vld [vmem:[#allocation8 + $0x4] sm:$0xf]
        %v678 = vld [vmem:[#allocation8 + $0x8] sm:$0xf]
        %v679 = vld [vmem:[#allocation8 + $0xc] sm:$0xf]
        %v680 = vld [vmem:[#allocation8 + $0x10] sm:$0xf]
        %v681 = vld [vmem:[#allocation8 + $0x14] sm:$0xf]
        %v682 = vld [vmem:[#allocation8 + $0x18] sm:$0xf]
        %v683 = vld [vmem:[#allocation8 + $0x1c] sm:$0xf]
        %v684 = vld [vmem:[#allocation8 + $0x20] sm:$0xf]
        %v685 = vld [vmem:[#allocation8 + $0x24] sm:$0xf]
        %v686 = vld [vmem:[#allocation8 + $0x28] sm:$0xf]
        %v687 = vld [vmem:[#allocation8 + $0x2c] sm:$0xf]
        %v688 = vld [vmem:[#allocation8 + $0x30] sm:$0xf]
        %v689 = vld [vmem:[#allocation8 + $0x34] sm:$0xf]
        %v690 = vld [vmem:[#allocation8 + $0x38] sm:$0xf]
        %v691 = vld [vmem:[#allocation8 + $0x3c] sm:$0xf]
        %v708 = vunpack.c.l.b16 %v676
        %v709 = vunpack.c.l.b16 %v677
        %v710 = vunpack.c.l.b16 %v678
        %v711 = vunpack.c.l.b16 %v679
        %v712 = vunpack.c.l.b16 %v680
        %v713 = vunpack.c.l.b16 %v681
        %v714 = vunpack.c.l.b16 %v682
        %v715 = vunpack.c.l.b16 %v683
        %v716 = vunpack.c.l.b16 %v684
        %v717 = vunpack.c.l.b16 %v685
        %v718 = vunpack.c.l.b16 %v686
        %v719 = vunpack.c.l.b16 %v687
        %v720 = vunpack.c.l.b16 %v688
        %v721 = vunpack.c.l.b16 %v689
        %v722 = vunpack.c.l.b16 %v690
        %v723 = vunpack.c.l.b16 %v691
        %v724 = vpack.c.b16 %v709, %v708
        %v725 = vpack.c.b16 %v711, %v710
        %v726 = vpack.c.b16 %v713, %v712
        %v727 = vpack.c.b16 %v715, %v714
        %v728 = vpack.c.b16 %v717, %v716
        %v729 = vpack.c.b16 %v719, %v718
        %v730 = vpack.c.b16 %v721, %v720
        %v731 = vpack.c.b16 %v723, %v722
        %740 = vmatpush.bf16.msra.mxu0 %v731
        %741 = vmatpush.bf16.msra.mxu0 %v730
        %742 = vmatpush.bf16.msra.mxu0 %v729
        %743 = vmatpush.bf16.msra.mxu0 %v728
        %744 = vmatpush.bf16.msra.mxu0 %v727
        %745 = vmatpush.bf16.msra.mxu0 %v726
        %746 = vmatpush.bf16.msra.mxu0 %v725
        %747 = vmatpush.bf16.msra.mxu0 %v724
        %748 = vmatmul.bf16.gmra.mxu0 %v675
        %v749 = vpop.f32.mrf.mxu0
        %v750 = vadd.f32 0.0, %v749
        %v751 = vpop.f32.mrf.mxu0
        %v752 = vadd.f32 0.0, %v751
        %753 = vdwg.mxu0
        %v754 = vpack.c.bf16 %v750, %v750
        %v755 = vpack.c.bf16 %v752, %v752
        %v756 = vld [vmem:[%s6] sm:$0x1]
        %v758 = vpack.i.b16 %v756, %v756
        %v760 = vperm.slane %v758, 0
        %v761 = vunpack.c.l.bf16 %v754
        %v762 = vunpack.c.l.bf16 %v755
        %v763 = vunpack.c.l.bf16 %v760
        %v764 = vadd.f32 %v761, %v763
        %v765 = vadd.f32 %v762, %v763
        %v766 = vpack.c.bf16 %v764, %v764
        %v767 = vpack.c.bf16 %v765, %v765
        %768 = vst [vmem:[%s380] sm:$0xf] %v571
        %769 = vst [vmem:[%s380 + $0x4] sm:$0xf] %v572
        %770 = vst [vmem:[%s387] sm:$0xf] %v766
        %771 = vst [vmem:[%s387 + $0x4] sm:$0xf] %v767
        %s772 = sand.u32 %s191, 1
        %s773 = scalar_lea.sflag [#allocation4], %s772
        %s774 = sand.u32 %s191, 1
        %s775 = smul.addr %s774, 8
        %s776 = scalar_lea.vmem [#allocation10], %s775
        %s777 = sand.u32 %s217, 1
        %s778 = scalar_lea.sflag [#allocation12], %s777
        %s779 = sand.u32 %s217, 1
        %s780 = smul.addr %s779, 8
        %s781 = scalar_lea.vmem [#allocation11], %s780
        // Predicated region
        $region65: #{tpu_custom_call.1} parent=47 // pred_check
          %p782 = pneg %p201
        $region66: #{tpu_custom_call.1} parent=47 // pred_check_branch
          %784 = sbr.rel (%p782) target = $region68
        $region67: #{tpu_custom_call.1} parent=47 // pred_region
          %s785 = smul.u32 2, %s31
          %787 = vsyncadd %s773, 0
          %s788 = smul.addr %s785, 4
          %s789 = scalar_lea.hbm %s7, %s788
          %s790 = sshll.u32 %s776, 4
          %s791 = int_to_ptr.vmem [resolvable:$true] %s790
          %s792 = sshll.u32 %s789, 4
          %s793 = int_to_ptr.hbm [resolvable:$true] %s792
          %798 = dma.vmem_to_hbm [thread:$0]  %s791, 128, %s793, %s773, 64, 64, 4
        $region68: #{tpu_custom_call.1} parent=47 // pred_fallthru
          _
        // Predicated region
        $region69: #{tpu_custom_call.1} parent=47 // pred_check
          %p799 = pneg %p227
        $region70: #{tpu_custom_call.1} parent=47 // pred_check_branch
          %801 = sbr.rel (%p799) target = $region72
        $region71: #{tpu_custom_call.1} parent=47 // pred_region
          %s802 = smul.u32 2, %s31
          %804 = vsyncadd %s778, 0
          %s805 = smul.addr %s802, 4
          %s806 = scalar_lea.hbm %s8, %s805
          %s807 = sshll.u32 %s781, 4
          %s808 = int_to_ptr.vmem [resolvable:$true] %s807
          %s809 = sshll.u32 %s806, 4
          %s810 = int_to_ptr.hbm [resolvable:$true] %s809
          %815 = dma.vmem_to_hbm [thread:$0]  %s808, 128, %s810, %s778, 64, 64, 4
        $region72: #{tpu_custom_call.1} parent=47 // pred_fallthru
          _
      $region48: #{tpu_custom_call.1} parent=5 // pred_fallthru
        _
      %p816 = scmp.le.s32.totalorder 2, %s26
      // Predicated region
      $region73: #{tpu_custom_call.1} parent=5 // pred_check
        %p817 = pneg %p816
      $region74: #{tpu_custom_call.1} parent=5 // pred_check_branch
        %819 = sbr.rel (%p817) target = $region76
      $region75: #{tpu_custom_call.1} parent=5 // pred_region
        %s820 = ssub.s32 %s26, 2
        // Predicated region
        $region77: #{tpu_custom_call.1} parent=75 // pred_check
          %p821 = pneg %p207
        $region78: #{tpu_custom_call.1} parent=75 // pred_check_branch
          %823 = sbr.rel (%p821) target = $region80
        $region79: #{tpu_custom_call.1} parent=75 // pred_region
          %s824 = sand.u32 %s192, 1
          %s825 = scalar_lea.sflag [#allocation4], %s824
          %s826 = sand.u32 %s192, 1
          %s827 = smul.addr %s826, 8
          %s828 = scalar_lea.vmem [#allocation10], %s827
          %830 = dma.done %s825, 128
        $region80: #{tpu_custom_call.1} parent=75 // pred_fallthru
          _
        // Predicated region
        $region81: #{tpu_custom_call.1} parent=75 // pred_check
          %p831 = pneg %p233
        $region82: #{tpu_custom_call.1} parent=75 // pred_check_branch
          %833 = sbr.rel (%p831) target = $region84
        $region83: #{tpu_custom_call.1} parent=75 // pred_region
          %s834 = sand.u32 %s218, 1
          %s835 = scalar_lea.sflag [#allocation12], %s834
          %s836 = sand.u32 %s218, 1
          %s837 = smul.addr %s836, 8
          %s838 = scalar_lea.vmem [#allocation11], %s837
          %840 = dma.done %s835, 128
        $region84: #{tpu_custom_call.1} parent=75 // pred_fallthru
          _
      $region76: #{tpu_custom_call.1} parent=5 // pred_fallthru
        _
    $region6: #{tpu_custom_call.1} parent=1 // loop_footer
      %s30 = sadd.s32 1, %s26
    $region7: #{tpu_custom_call.1} parent=1 // loop_footer_branch
      %25 = sbr.rel target = $region3
    $region8: #{tpu_custom_call.1} parent=1 // loop_exit
      _
    %841 = vsyncpa [#allocation3], 1
    %s842 = scalar_lea.sflag [#allocation3], 1
    %843 = vsyncpa %s842, 1
    %844 = vsyncpa [#allocation6], 1
    %845 = vsyncpa [#allocation9], 1
    %846 = vsyncpa [#allocation4], 1
    %s847 = scalar_lea.sflag [#allocation4], 1
    %848 = vsyncpa %s847, 1
    %849 = vsyncpa [#allocation12], 1
    %s850 = scalar_lea.sflag [#allocation12], 1
    %851 = vsyncpa %s850, 1

</llo_original>
